<compile_context>
chip_gen: v7x
topology: tpu7x:2x2x1
jax: 0.10.0
libtpu: 0.0.40
codegen_flags: <defaults>
</compile_context>

<pallas_src>
import functools

import jax
import jax.numpy as jnp
from jax.experimental import pallas as pl
from jax.experimental.pallas import tpu as pltpu

EPS = 1e-5          # nn.BatchNorm2d default eps
LANE = 128          # TPU lane width: output channels padded to a multiple of this
VMEM_LIMIT = 48 * 1024 * 1024   # headroom below v7x's 64 MiB physical VMEM


# ----------------------------------------------------------------------------
# Small host-side helpers
# ----------------------------------------------------------------------------
def _round_up(x, m):
    return (x + m - 1) // m * m


def _pad2d(a, rows, cols):
    return jnp.pad(a, ((0, rows - a.shape[0]), (0, cols - a.shape[1])))


def _pad_vec(v, n):
    v = v.reshape(-1)
    return jnp.pad(v, (0, n - v.shape[0]))


# ----------------------------------------------------------------------------
# Kernel 1: tiled matmul (bf16 in, f32 accumulate) + per-tile BN partial stats
# ----------------------------------------------------------------------------
def _matmul_stats_kernel(x_ref, w_ref, y_ref, st_ref):
    # x: (TM, K) bf16   w: (K, Cp) bf16 (resident)   y: (TM, Cp) f32
    # st: (8, Cp) f32 partial-stats rows: row0 = sum, row1 = sum of squares.
    y = jnp.dot(x_ref[...], w_ref[...], preferred_element_type=jnp.float32)
    y_ref[...] = y
    s1 = jnp.sum(y, axis=0, keepdims=True)          # XLU reduce, overlaps MXU
    s2 = jnp.sum(y * y, axis=0, keepdims=True)
    zeros = jnp.zeros((6, y.shape[1]), jnp.float32)
    st_ref[...] = jnp.concatenate([s1, s2, zeros], axis=0)


def matmul_partial_stats(x, w, block_rows):
    """x: (Mp, K) bf16, w: (K, Cp) bf16 -> y (Mp, Cp) f32, pstats (nt*8, Cp) f32."""
    Mp, K = x.shape
    Kw, Cp = w.shape
    assert Kw == K and Mp % block_rows == 0 and Cp % LANE == 0
    nt = Mp // block_rows
    flops = 2 * Mp * K * Cp + 3 * Mp * Cp
    bytes_acc = (x.size * x.dtype.itemsize + w.size * w.dtype.itemsize
                 + Mp * Cp * 4 + nt * 8 * Cp * 4)
    y, pstats = pl.pallas_call(
        _matmul_stats_kernel,
        grid=(nt,),
        in_specs=[
            pl.BlockSpec((block_rows, K), lambda i: (i, 0)),   # M-tiled activations
            pl.BlockSpec((K, Cp), lambda i: (0, 0)),           # weight stays resident
        ],
        out_specs=[
            pl.BlockSpec((block_rows, Cp), lambda i: (i, 0)),  # lane-dense (Cp%128==0)
            pl.BlockSpec((8, Cp), lambda i: (i, 0)),           # per-tile partial stats
        ],
        out_shape=[
            jax.ShapeDtypeStruct((Mp, Cp), jnp.float32),
            jax.ShapeDtypeStruct((nt * 8, Cp), jnp.float32),
        ],
        compiler_params=pltpu.CompilerParams(
            dimension_semantics=("parallel",),
            vmem_limit_bytes=VMEM_LIMIT),
        cost_estimate=pl.CostEstimate(flops=int(flops), transcendentals=0,
                                      bytes_accessed=int(bytes_acc)),
    )(x, w)
    return y, pstats


def finalize_bn_scale_shift(pstats, m_true, gamma, beta):
    """Tiny O(C) reduction of the per-tile partial stats -> fused scale/shift."""
    Cp = pstats.shape[-1]
    pst = pstats.reshape(-1, 8, Cp)
    total = jnp.sum(pst[:, 0, :], axis=0)
    total_sq = jnp.sum(pst[:, 1, :], axis=0)
    mean = total / m_true
    var = jnp.maximum(total_sq / m_true - mean * mean, 0.0)   # biased var (PyTorch)
    scale = gamma * jax.lax.rsqrt(var + EPS)
    shift = beta - mean * scale
    return scale.reshape(1, Cp), shift.reshape(1, Cp)


# ----------------------------------------------------------------------------
# Kernel 2 family: tiled BN-apply (+ residual) + ReLU, all math in f32
# ----------------------------------------------------------------------------
def _bn_relu_kernel(y_ref, s_ref, t_ref, o_ref):
    o_ref[...] = jnp.maximum(
        y_ref[...] * s_ref[...] + t_ref[...], 0.0).astype(o_ref.dtype)


def _bn_add_relu_kernel(y_ref, s_ref, t_ref, r_ref, o_ref):
    o_ref[...] = jnp.maximum(
        y_ref[...] * s_ref[...] + t_ref[...] + r_ref[...], 0.0).astype(o_ref.dtype)


def _bn_bn_add_relu_kernel(y_ref, s_ref, t_ref, ysc_ref, ssc_ref, tsc_ref, o_ref):
    o_ref[...] = jnp.maximum(
        y_ref[...] * s_ref[...] + t_ref[...]
        + ysc_ref[...] * ssc_ref[...] + tsc_ref[...], 0.0).astype(o_ref.dtype)


def bn_apply(kernel, out_dtype, block_rows, *operands):
    """Row-tiled elementwise pass. (Mp, C)-shaped operands are M-tiled,
    (1, Cp) per-channel vectors are pinned (constant index_map, DMA'd once)."""
    Mp, Cp = operands[0].shape
    nt = Mp // block_rows
    in_specs = []
    n_slab = 0
    for a in operands:
        if a.shape[0] == Mp:
            n_slab += 1
            in_specs.append(pl.BlockSpec((block_rows, a.shape[1]), lambda i: (i, 0)))
        else:
            in_specs.append(pl.BlockSpec(a.shape, lambda i: (0, 0)))
    bytes_acc = (sum(a.size * a.dtype.itemsize for a in operands)
                 + Mp * Cp * jnp.dtype(out_dtype).itemsize)
    flops = 3 * Mp * Cp * n_slab
    return pl.pallas_call(
        kernel,
        grid=(nt,),
        in_specs=in_specs,
        out_specs=pl.BlockSpec((block_rows, Cp), lambda i: (i, 0)),
        out_shape=jax.ShapeDtypeStruct((Mp, Cp), out_dtype),
        compiler_params=pltpu.CompilerParams(
            dimension_semantics=("parallel",),
            vmem_limit_bytes=VMEM_LIMIT),
        cost_estimate=pl.CostEstimate(flops=int(flops), transcendentals=0,
                                      bytes_accessed=int(bytes_acc)),
    )(*operands)


# ----------------------------------------------------------------------------
# JAX glue: im2col (layout transform only — compute stays in the kernels)
# ----------------------------------------------------------------------------
def im2col_3x3(x, stride=1):
    """x: (N,H,W,C) -> cols: (N*Ho*Wo, 9*C) for a 3x3 conv, padding=1."""
    N, H, W, C = x.shape
    Ho = (H - 1) // stride + 1
    Wo = (W - 1) // stride + 1
    xp = jnp.pad(x, ((0, 0), (1, 1), (1, 1), (0, 0)))
    patches = []
    for kh in range(3):
        for kw in range(3):
            patches.append(
                xp[:, kh:kh + (Ho - 1) * stride + 1:stride,
                      kw:kw + (Wo - 1) * stride + 1:stride, :])
    cols = jnp.concatenate(patches, axis=-1)          # (N, Ho, Wo, 9*C)
    return cols.reshape(N * Ho * Wo, 9 * C), Ho, Wo


# ----------------------------------------------------------------------------
# BasicBlock forward (composes the Pallas kernels)
# ----------------------------------------------------------------------------
def basic_block_forward(x_nhwc, params, stride=1, block_rows=512):
    N, H, W, Cin = x_nhwc.shape
    Cout = params["w1"].shape[-1]
    Cp = _round_up(Cout, LANE)
    has_proj = (stride != 1) or (Cin != Cout)

    x_bf = x_nhwc.astype(jnp.bfloat16)

    # ---- conv1 (3x3, stride) + bn1 + relu -----------------------------------
    cols1, Ho, Wo = im2col_3x3(x_bf, stride)
    M = N * Ho * Wo
    tm = min(block_rows, _round_up(M, 16))
    Mp = _round_up(M, tm)

    cols1 = jnp.pad(cols1, ((0, Mp - M), (0, 0)))
    w1 = _pad2d(params["w1"].reshape(9 * Cin, Cout), 9 * Cin, Cp).astype(jnp.bfloat16)
    y1, pst1 = matmul_partial_stats(cols1, w1, tm)
    s1, t1 = finalize_bn_scale_shift(pst1, M,
                                     _pad_vec(params["g1"], Cp),
                                     _pad_vec(params["b1"], Cp))
    out1 = bn_apply(_bn_relu_kernel, jnp.bfloat16, tm, y1, s1, t1)   # (Mp, Cp) bf16

    # ---- conv2 (3x3, stride 1) + bn2 + shortcut + relu ----------------------
    out1_nhwc = out1[:M, :Cout].reshape(N, Ho, Wo, Cout)
    cols2, _, _ = im2col_3x3(out1_nhwc, 1)
    cols2 = jnp.pad(cols2, ((0, Mp - M), (0, 0)))
    w2 = _pad2d(params["w2"].reshape(9 * Cout, Cout), 9 * Cout, Cp).astype(jnp.bfloat16)
    y2, pst2 = matmul_partial_stats(cols2, w2, tm)
    s2, t2 = finalize_bn_scale_shift(pst2, M,
                                     _pad_vec(params["g2"], Cp),
                                     _pad_vec(params["b2"], Cp))

    if has_proj:
        # 1x1 conv (strided) + BN projection shortcut
        xs = x_bf[:, ::stride, ::stride, :].reshape(M, Cin)
        xs = jnp.pad(xs, ((0, Mp - M), (0, 0)))
        wsc = _pad2d(params["wsc"], Cin, Cp).astype(jnp.bfloat16)
        ysc, pstsc = matmul_partial_stats(xs, wsc, tm)
        ssc, tsc = finalize_bn_scale_shift(pstsc, M,
                                           _pad_vec(params["gsc"], Cp),
                                           _pad_vec(params["bsc"], Cp))
        out = bn_apply(_bn_bn_add_relu_kernel, jnp.float32, tm,
                       y2, s2, t2, ysc, ssc, tsc)
    else:
        # identity shortcut (stride==1 and Cin==Cout), kept in f32
        res = _pad2d(x_nhwc.reshape(M, Cin), Mp, Cp)
        out = bn_apply(_bn_add_relu_kernel, jnp.float32, tm, y2, s2, t2, res)

    return out[:M, :Cout].reshape(N, Ho, Wo, Cout)


# ----------------------------------------------------------------------------
# Deterministic parameter init (shapes from BasicBlock.__init__)
# ----------------------------------------------------------------------------
def init_basic_block_params(key, in_planes, planes, stride=1):
    k1, k2, k3, k4, k5 = jax.random.split(key, 5)
    params = {
        "w1": 0.1 * jax.random.normal(k1, (3, 3, in_planes, planes), jnp.float32),
        "g1": 1.0 + 0.1 * jax.random.normal(k4, (1, planes), jnp.float32),
        "b1": 0.1 * jax.random.normal(k5, (1, planes), jnp.float32),
        "w2": 0.1 * jax.random.normal(k2, (3, 3, planes, planes), jnp.float32),
        "g2": jnp.ones((1, planes), jnp.float32),
        "b2": jnp.zeros((1, planes), jnp.float32),
    }
    if stride != 1 or in_planes != planes:
        params["wsc"] = 0.1 * jax.random.normal(k3, (in_planes, planes), jnp.float32)
        params["gsc"] = jnp.ones((1, planes), jnp.float32)
        params["bsc"] = jnp.zeros((1, planes), jnp.float32)
    return params


# ----------------------------------------------------------------------------
# Pure-JAX f32 reference (for sanity checking the kernels)
# ----------------------------------------------------------------------------
def reference_basic_block(x, params, stride=1):
    def conv(x, w, s, pad):
        return jax.lax.conv_general_dilated(
            x, w, window_strides=(s, s), padding=pad,
            dimension_numbers=("NHWC", "HWIO", "NHWC"))

    def bn(x, g, b):
        mean = jnp.mean(x, axis=(0, 1, 2), keepdims=True)
        var = jnp.mean((x - mean) ** 2, axis=(0, 1, 2), keepdims=True)
        return (g.reshape(1, 1, 1, -1) * (x - mean) * jax.lax.rsqrt(var + EPS)
                + b.reshape(1, 1, 1, -1))

    out = jax.nn.relu(bn(conv(x, params["w1"], stride, ((1, 1), (1, 1))),
                         params["g1"], params["b1"]))
    out = bn(conv(out, params["w2"], 1, ((1, 1), (1, 1))),
             params["g2"], params["b2"])
    if "wsc" in params:
        sc = bn(conv(x, params["wsc"][None, None], stride, "VALID"),
                params["gsc"], params["bsc"])
    else:
        sc = x
    return jax.nn.relu(out + sc)


if __name__ == "__main__":
    key = jax.random.PRNGKey(0)
    kx, kp1, kp2 = jax.random.split(key, 3)

    # PyTorch-style NCHW input (batch=2, channels=4, 16x16), converted to NHWC.
    x_nchw = jax.random.normal(kx, (2, 4, 16, 16), jnp.float32)
    x_nhwc = jnp.transpose(x_nchw, (0, 2, 3, 1))

    # Case 1: BasicBlock(4, 4, stride=1) -> identity shortcut.
    # block_rows=128 forces a multi-tile grid (M=512 -> 4 tiles) so the
    # tiled two-pass BatchNorm path is actually exercised.
    p1 = init_basic_block_params(kp1, 4, 4, stride=1)
    fwd1 = jax.jit(functools.partial(basic_block_forward, stride=1, block_rows=128))
    y1 = fwd1(x_nhwc, p1)
    jax.block_until_ready(y1)
    r1 = reference_basic_block(x_nhwc, p1, stride=1)
    assert y1.shape == (2, 16, 16, 4)
    # bf16 MXU inputs (f32 accumulation) -> slightly looser tolerance than f32.
    assert jnp.allclose(y1, r1, atol=3e-2, rtol=3e-2), "identity-shortcut mismatch"

    # Case 2: BasicBlock(4, 8, stride=2) -> 1x1-conv + BN projection shortcut
    p2 = init_basic_block_params(kp2, 4, 8, stride=2)
    fwd2 = jax.jit(functools.partial(basic_block_forward, stride=2, block_rows=512))
    y2 = fwd2(x_nhwc, p2)
    jax.block_until_ready(y2)
    r2 = reference_basic_block(x_nhwc, p2, stride=2)
    assert y2.shape == (2, 8, 8, 8)
    assert jnp.allclose(y2, r2, atol=3e-2, rtol=3e-2), "projection-shortcut mismatch"

    print("KERNEL_OK")
</pallas_src>

<mosaic_0001>
module attributes {stable_mosaic.version = 11 : i64} {
  func.func @_matmul_stats_kernel(%arg0: i32, %arg1: memref<128x36xbf16, #tpu.memory_space<vmem>>, %arg2: memref<36x128xbf16, #tpu.memory_space<vmem>>, %arg3: memref<128x128xf32, #tpu.memory_space<vmem>>, %arg4: memref<8x128xf32, #tpu.memory_space<vmem>>) attributes {dimension_semantics = [#tpu.dimension_semantics<parallel>], iteration_bounds = array<i64: 4>, scalar_prefetch = 0 : i64, scratch_operands = 0 : i64, tpu.core_type = #tpu.core_type<tc>, window_params = [{transform_indices = @transform_0, window_bounds = array<i64: 128, 36>}, {pipeline_mode = #tpu.pipeline_mode<synchronous>, transform_indices = @transform_1, window_bounds = array<i64: 36, 128>}, {transform_indices = @transform_2, window_bounds = array<i64: 128, 128>}, {transform_indices = @transform_3, window_bounds = array<i64: 8, 128>}]} {
    %c0 = arith.constant 0 : index
    %c0_0 = arith.constant 0 : index
    %0 = vector.load %arg1[%c0, %c0_0] : memref<128x36xbf16, #tpu.memory_space<vmem>>, vector<128x36xbf16>
    %c0_1 = arith.constant 0 : index
    %c0_2 = arith.constant 0 : index
    %1 = vector.load %arg2[%c0_1, %c0_2] : memref<36x128xbf16, #tpu.memory_space<vmem>>, vector<36x128xbf16>
    %cst = arith.constant dense<0.000000e+00> : vector<128x128xf32>
    %2 = tpu.matmul %0, %1, %cst {dimension_numbers = #tpu.dot_dimension_numbers<[1], [0], [0], [1], [0, 0, 1, 1], [], []>} : vector<128x36xbf16>, vector<36x128xbf16>, vector<128x128xf32> -> vector<128x128xf32>
    %c0_3 = arith.constant 0 : index
    %c0_4 = arith.constant 0 : index
    %3 = vector.load %arg3[%c0_3, %c0_4] : memref<128x128xf32, #tpu.memory_space<vmem>>, vector<128x128xf32>
    tpu.vector_store %arg3[%c0_3, %c0_4], %2 {strides = array<i32>} : memref<128x128xf32, #tpu.memory_space<vmem>>, vector<128x128xf32>,
    %cst_5 = arith.constant dense<0.000000e+00> : vector<128xf32>
    %4 = vector.multi_reduction <add>, %2, %cst_5 [0] : vector<128x128xf32> to vector<128xf32>
    %5 = vector.shape_cast %4 : vector<128xf32> to vector<1x128xf32>
    %6 = arith.mulf %2, %2 : vector<128x128xf32>
    %cst_6 = arith.constant dense<0.000000e+00> : vector<128xf32>
    %7 = vector.multi_reduction <add>, %6, %cst_6 [0] : vector<128x128xf32> to vector<128xf32>
    %8 = vector.shape_cast %7 : vector<128xf32> to vector<1x128xf32>
    %cst_7 = arith.constant 0.000000e+00 : f32
    %9 = vector.broadcast %cst_7 : f32 to vector<6x128xf32>
    %10 = tpu.concatenate %5, %8, %9 in 0 : vector<1x128xf32>, vector<1x128xf32>, vector<6x128xf32> -> vector<8x128xf32>
    %c0_8 = arith.constant 0 : index
    %c0_9 = arith.constant 0 : index
    %11 = vector.load %arg4[%c0_8, %c0_9] : memref<8x128xf32, #tpu.memory_space<vmem>>, vector<8x128xf32>
    tpu.vector_store %arg4[%c0_8, %c0_9], %10 {strides = array<i32>} : memref<8x128xf32, #tpu.memory_space<vmem>>, vector<8x128xf32>,
    return
  }
  func.func @transform_0(%arg0: i32) -> (i32, i32) {
    %c0_i32 = arith.constant 0 : i32
    %c0_i32_0 = arith.constant 0 : i32
    return %arg0, %c0_i32 : i32, i32
  }
  func.func @transform_1(%arg0: i32) -> (i32, i32) {
    %c0_i32 = arith.constant 0 : i32
    %c0_i32_0 = arith.constant 0 : i32
    %c0_i32_1 = arith.constant 0 : i32
    return %c0_i32, %c0_i32_0 : i32, i32
  }
  func.func @transform_2(%arg0: i32) -> (i32, i32) {
    %c0_i32 = arith.constant 0 : i32
    %c0_i32_0 = arith.constant 0 : i32
    return %arg0, %c0_i32 : i32, i32
  }
  func.func @transform_3(%arg0: i32) -> (i32, i32) {
    %c0_i32 = arith.constant 0 : i32
    %c0_i32_0 = arith.constant 0 : i32
    return %arg0, %c0_i32 : i32, i32
  }
}

module attributes {stable_mosaic.version = 11 : i64} {
  func.func @_bn_relu_kernel(%arg0: i32, %arg1: memref<128x128xf32, #tpu.memory_space<vmem>>, %arg2: memref<1x128xf32, #tpu.memory_space<vmem>>, %arg3: memref<1x128xf32, #tpu.memory_space<vmem>>, %arg4: memref<128x128xbf16, #tpu.memory_space<vmem>>) attributes {dimension_semantics = [#tpu.dimension_semantics<parallel>], iteration_bounds = array<i64: 4>, scalar_prefetch = 0 : i64, scratch_operands = 0 : i64, tpu.core_type = #tpu.core_type<tc>, window_params = [{transform_indices = @transform_0, window_bounds = array<i64: 128, 128>}, {pipeline_mode = #tpu.pipeline_mode<synchronous>, transform_indices = @transform_1, window_bounds = array<i64: 1, 128>}, {pipeline_mode = #tpu.pipeline_mode<synchronous>, transform_indices = @transform_2, window_bounds = array<i64: 1, 128>}, {transform_indices = @transform_3, window_bounds = array<i64: 128, 128>}]} {
    %c0 = arith.constant 0 : index
    %c0_0 = arith.constant 0 : index
    %0 = vector.load %arg1[%c0, %c0_0] : memref<128x128xf32, #tpu.memory_space<vmem>>, vector<128x128xf32>
    %c0_1 = arith.constant 0 : index
    %c0_2 = arith.constant 0 : index
    %1 = vector.load %arg2[%c0_1, %c0_2] : memref<1x128xf32, #tpu.memory_space<vmem>>, vector<1x128xf32>
    %2 = vector.broadcast %1 : vector<1x128xf32> to vector<128x128xf32>
    %3 = arith.mulf %0, %2 : vector<128x128xf32>
    %c0_3 = arith.constant 0 : index
    %c0_4 = arith.constant 0 : index
    %4 = vector.load %arg3[%c0_3, %c0_4] : memref<1x128xf32, #tpu.memory_space<vmem>>, vector<1x128xf32>
    %5 = vector.broadcast %4 : vector<1x128xf32> to vector<128x128xf32>
    %6 = arith.addf %3, %5 : vector<128x128xf32>
    %cst = arith.constant 0.000000e+00 : f32
    %7 = vector.broadcast %cst : f32 to vector<128x128xf32>
    %8 = arith.maximumf %6, %7 : vector<128x128xf32>
    %9 = arith.truncf %8 : vector<128x128xf32> to vector<128x128xbf16>
    %c0_5 = arith.constant 0 : index
    %c0_6 = arith.constant 0 : index
    %10 = vector.load %arg4[%c0_5, %c0_6] : memref<128x128xbf16, #tpu.memory_space<vmem>>, vector<128x128xbf16>
    tpu.vector_store %arg4[%c0_5, %c0_6], %9 {strides = array<i32>} : memref<128x128xbf16, #tpu.memory_space<vmem>>, vector<128x128xbf16>,
    return
  }
  func.func @transform_0(%arg0: i32) -> (i32, i32) {
    %c0_i32 = arith.constant 0 : i32
    %c0_i32_0 = arith.constant 0 : i32
    return %arg0, %c0_i32 : i32, i32
  }
  func.func @transform_1(%arg0: i32) -> (i32, i32) {
    %c0_i32 = arith.constant 0 : i32
    %c0_i32_0 = arith.constant 0 : i32
    %c0_i32_1 = arith.constant 0 : i32
    return %c0_i32, %c0_i32_0 : i32, i32
  }
  func.func @transform_2(%arg0: i32) -> (i32, i32) {
    %c0_i32 = arith.constant 0 : i32
    %c0_i32_0 = arith.constant 0 : i32
    %c0_i32_1 = arith.constant 0 : i32
    return %c0_i32, %c0_i32_0 : i32, i32
  }
  func.func @transform_3(%arg0: i32) -> (i32, i32) {
    %c0_i32 = arith.constant 0 : i32
    %c0_i32_0 = arith.constant 0 : i32
    return %arg0, %c0_i32 : i32, i32
  }
}

module attributes {stable_mosaic.version = 11 : i64} {
  func.func @_bn_add_relu_kernel(%arg0: i32, %arg1: memref<128x128xf32, #tpu.memory_space<vmem>>, %arg2: memref<1x128xf32, #tpu.memory_space<vmem>>, %arg3: memref<1x128xf32, #tpu.memory_space<vmem>>, %arg4: memref<128x128xf32, #tpu.memory_space<vmem>>, %arg5: memref<128x128xf32, #tpu.memory_space<vmem>>) attributes {dimension_semantics = [#tpu.dimension_semantics<parallel>], iteration_bounds = array<i64: 4>, scalar_prefetch = 0 : i64, scratch_operands = 0 : i64, tpu.core_type = #tpu.core_type<tc>, window_params = [{transform_indices = @transform_0, window_bounds = array<i64: 128, 128>}, {pipeline_mode = #tpu.pipeline_mode<synchronous>, transform_indices = @transform_1, window_bounds = array<i64: 1, 128>}, {pipeline_mode = #tpu.pipeline_mode<synchronous>, transform_indices = @transform_2, window_bounds = array<i64: 1, 128>}, {transform_indices = @transform_3, window_bounds = array<i64: 128, 128>}, {transform_indices = @transform_4, window_bounds = array<i64: 128, 128>}]} {
    %c0 = arith.constant 0 : index
    %c0_0 = arith.constant 0 : index
    %0 = vector.load %arg1[%c0, %c0_0] : memref<128x128xf32, #tpu.memory_space<vmem>>, vector<128x128xf32>
    %c0_1 = arith.constant 0 : index
    %c0_2 = arith.constant 0 : index
    %1 = vector.load %arg2[%c0_1, %c0_2] : memref<1x128xf32, #tpu.memory_space<vmem>>, vector<1x128xf32>
    %2 = vector.broadcast %1 : vector<1x128xf32> to vector<128x128xf32>
    %3 = arith.mulf %0, %2 : vector<128x128xf32>
    %c0_3 = arith.constant 0 : index
    %c0_4 = arith.constant 0 : index
    %4 = vector.load %arg3[%c0_3, %c0_4] : memref<1x128xf32, #tpu.memory_space<vmem>>, vector<1x128xf32>
    %5 = vector.broadcast %4 : vector<1x128xf32> to vector<128x128xf32>
    %6 = arith.addf %3, %5 : vector<128x128xf32>
    %c0_5 = arith.constant 0 : index
    %c0_6 = arith.constant 0 : index
    %7 = vector.load %arg4[%c0_5, %c0_6] : memref<128x128xf32, #tpu.memory_space<vmem>>, vector<128x128xf32>
    %8 = arith.addf %6, %7 : vector<128x128xf32>
    %cst = arith.constant 0.000000e+00 : f32
    %9 = vector.broadcast %cst : f32 to vector<128x128xf32>
    %10 = arith.maximumf %8, %9 : vector<128x128xf32>
    %c0_7 = arith.constant 0 : index
    %c0_8 = arith.constant 0 : index
    %11 = vector.load %arg5[%c0_7, %c0_8] : memref<128x128xf32, #tpu.memory_space<vmem>>, vector<128x128xf32>
    tpu.vector_store %arg5[%c0_7, %c0_8], %10 {strides = array<i32>} : memref<128x128xf32, #tpu.memory_space<vmem>>, vector<128x128xf32>,
    return
  }
  func.func @transform_0(%arg0: i32) -> (i32, i32) {
    %c0_i32 = arith.constant 0 : i32
    %c0_i32_0 = arith.constant 0 : i32
    return %arg0, %c0_i32 : i32, i32
  }
  func.func @transform_1(%arg0: i32) -> (i32, i32) {
    %c0_i32 = arith.constant 0 : i32
    %c0_i32_0 = arith.constant 0 : i32
    %c0_i32_1 = arith.constant 0 : i32
    return %c0_i32, %c0_i32_0 : i32, i32
  }
  func.func @transform_2(%arg0: i32) -> (i32, i32) {
    %c0_i32 = arith.constant 0 : i32
    %c0_i32_0 = arith.constant 0 : i32
    %c0_i32_1 = arith.constant 0 : i32
    return %c0_i32, %c0_i32_0 : i32, i32
  }
  func.func @transform_3(%arg0: i32) -> (i32, i32) {
    %c0_i32 = arith.constant 0 : i32
    %c0_i32_0 = arith.constant 0 : i32
    return %arg0, %c0_i32 : i32, i32
  }
  func.func @transform_4(%arg0: i32) -> (i32, i32) {
    %c0_i32 = arith.constant 0 : i32
    %c0_i32_0 = arith.constant 0 : i32
    return %arg0, %c0_i32 : i32, i32
  }
}

</mosaic_0001>

<llo_original>
// kernel: basic_block_forward.5
$region0: #{basic_block_forward.5}
  #allocation0 [shape = 'u32[]', space=smem, size = 0x4, offset = 0x4, fixed_abs, tag = 'smem constant byte address 0x4 - core index']
  #allocation1 [shape = 'u32[144,128]{1,0:T(1,128)}', space=vmem, size = 0x12000, scoped, tag = 'internal scratch']
  %s0 = inlined_call_operand.vmem [shape: f32[512,128], index: 0, kind: input, shape index: {}]
  %s1 = inlined_call_operand.vmem [shape: f32[1,128], index: 1, kind: input, shape index: {}]
  %s2 = inlined_call_operand.vmem [shape: f32[1,128], index: 2, kind: input, shape index: {}]
  %s3 = inlined_call_operand.vmem [shape: bf16[512,128], index: 3, kind: output, shape index: {}]
  %s4 = sld [smem:[#allocation0]]
  $region45: #{basic_block_forward.5} parent=0
    _
  %s6 = ssub.s32 1, %s4
  %s7 = scalar_select 0, %s6, %s4
  loop: start=0, step=1, limit=6
  $region2: #{basic_block_forward.5} parent=0 // loop_pre_header
    _
  $region3: #{basic_block_forward.5} parent=0 // loop_header
    %s9 = sphi 0, %s13
    %p10 = scmp.ge.s32.totalorder %s9, 6
    %s19 = sphi 0, %s21
    %s22 = sphi 0, %s19
    %s23 = sphi 0, %s22
    %s39 = sphi 0, %s23
    %s43 = sphi 0, %s43
    %s45 = sphi 0, %s43
    %s46 = sphi 0, %s45
    %s60 = sphi 0, %s46
    %s64 = sphi 0, %s64
    %s66 = sphi 0, %s64
    %s67 = sphi 0, %s66
    %s81 = sphi 0, %s67
    %s87 = sphi 0, %s89
    %s90 = sphi 0, %s87
    %s91 = sphi 0, %s90
    %s107 = sphi 0, %s91
  $region4: #{basic_block_forward.5} parent=0 // loop_header_branch
    %12 = sbr.rel (%p10) target = $region8
  $region5: #{basic_block_forward.5} parent=0 // loop_body
    %s14 = ssub.s32 %s9, 1
    %s15 = ssub.s32 %s9, 2
    %s16 = sadd.s32 %s9, 1
    %s17 = ssub.s32 %s9, %s16
    %p18 = scmp.eq.s32.totalorder %s17, 0
    %s20 = sadd.s32 %s19, 1
    %s21 = scalar_select %p18, %s19, %s20
    %p24 = pneg %p18
    %p25 = scmp.eq.s32.totalorder %s9, 3
    %p26 = por %p24, %p25
    %p27 = scmp.ne.s32.totalorder %s19, %s22
    %p28 = scmp.eq.s32.totalorder %s9, 0
    %p29 = por %p27, %p28
    %p30 = scmp.ne.s32.totalorder %s19, %s22
    %p31 = scmp.eq.s32.totalorder %s14, 3
    %p32 = por %p30, %p31
    %p33 = scmp.ne.s32.totalorder %s22, %s23
    %p34 = scmp.eq.s32.totalorder %s14, 0
    %p35 = por %p33, %p34
    %p36 = scmp.ne.s32.totalorder %s22, %s23
    %p37 = scmp.eq.s32.totalorder %s15, 3
    %p38 = por %p36, %p37
    %p40 = scmp.ne.s32.totalorder %s23, %s39
    %p41 = scmp.eq.s32.totalorder %s15, 0
    %p42 = por %p40, %p41
    %s44 = sadd.s32 %s43, 1
    %p47 = scmp.eq.s32.totalorder %s9, 3
    %p48 = scmp.ne.s32.totalorder %s43, %s45
    %p49 = scmp.eq.s32.totalorder %s9, 0
    %p50 = por %p48, %p49
    %p51 = scmp.ne.s32.totalorder %s43, %s45
    %p52 = scmp.eq.s32.totalorder %s14, 3
    %p53 = por %p51, %p52
    %p54 = scmp.ne.s32.totalorder %s45, %s46
    %p55 = scmp.eq.s32.totalorder %s14, 0
    %p56 = por %p54, %p55
    %p57 = scmp.ne.s32.totalorder %s45, %s46
    %p58 = scmp.eq.s32.totalorder %s15, 3
    %p59 = por %p57, %p58
    %p61 = scmp.ne.s32.totalorder %s46, %s60
    %p62 = scmp.eq.s32.totalorder %s15, 0
    %p63 = por %p61, %p62
    %s65 = sadd.s32 %s64, 1
    %p68 = scmp.eq.s32.totalorder %s9, 3
    %p69 = scmp.ne.s32.totalorder %s64, %s66
    %p70 = scmp.eq.s32.totalorder %s9, 0
    %p71 = por %p69, %p70
    %p72 = scmp.ne.s32.totalorder %s64, %s66
    %p73 = scmp.eq.s32.totalorder %s14, 3
    %p74 = por %p72, %p73
    %p75 = scmp.ne.s32.totalorder %s66, %s67
    %p76 = scmp.eq.s32.totalorder %s14, 0
    %p77 = por %p75, %p76
    %p78 = scmp.ne.s32.totalorder %s66, %s67
    %p79 = scmp.eq.s32.totalorder %s15, 3
    %p80 = por %p78, %p79
    %p82 = scmp.ne.s32.totalorder %s67, %s81
    %p83 = scmp.eq.s32.totalorder %s15, 0
    %p84 = por %p82, %p83
    %s85 = ssub.s32 %s9, %s16
    %p86 = scmp.eq.s32.totalorder %s85, 0
    %s88 = sadd.s32 %s87, 1
    %s89 = scalar_select %p86, %s87, %s88
    %p92 = pneg %p86
    %p93 = scmp.eq.s32.totalorder %s9, 3
    %p94 = por %p92, %p93
    %p95 = scmp.ne.s32.totalorder %s87, %s90
    %p96 = scmp.eq.s32.totalorder %s9, 0
    %p97 = por %p95, %p96
    %p98 = scmp.ne.s32.totalorder %s87, %s90
    %p99 = scmp.eq.s32.totalorder %s14, 3
    %p100 = por %p98, %p99
    %p101 = scmp.ne.s32.totalorder %s90, %s91
    %p102 = scmp.eq.s32.totalorder %s14, 0
    %p103 = por %p101, %p102
    %p104 = scmp.ne.s32.totalorder %s90, %s91
    %p105 = scmp.eq.s32.totalorder %s15, 3
    %p106 = por %p104, %p105
    %p108 = scmp.ne.s32.totalorder %s91, %s107
    %p109 = scmp.eq.s32.totalorder %s15, 0
    %p110 = por %p108, %p109
    %p111 = scmp.le.s32.totalorder 1, %s9
    %p112 = scmp.lt.s32.totalorder %s9, 5
    %p113 = pnand %p111, %p112
    %p114 = pneg %p113
    // Predicated region
    $region9: #{basic_block_forward.5} parent=5 // pred_check
      _
    $region10: #{basic_block_forward.5} parent=5 // pred_check_branch
      %116 = sbr.rel (%p113) target = $region12
    $region11: #{basic_block_forward.5} parent=5 // pred_region
      %s117 = ssub.s32 %s9, 1
      // Predicated region
      $region13: #{basic_block_forward.5} parent=11 // pred_check
        %p118 = pneg %p56
      $region14: #{basic_block_forward.5} parent=11 // pred_check_branch
        %120 = sbr.rel (%p118) target = $region16
      $region15: #{basic_block_forward.5} parent=11 // pred_region
        _
      $region16: #{basic_block_forward.5} parent=11 // pred_fallthru
        _
      // Predicated region
      $region17: #{basic_block_forward.5} parent=11 // pred_check
        %p121 = pneg %p77
      $region18: #{basic_block_forward.5} parent=11 // pred_check_branch
        %123 = sbr.rel (%p121) target = $region20
      $region19: #{basic_block_forward.5} parent=11 // pred_region
        _
      $region20: #{basic_block_forward.5} parent=11 // pred_fallthru
        _
    $region12: #{basic_block_forward.5} parent=5 // pred_fallthru
      _
    %p124 = scmp.lt.s32.totalorder %s9, 4
    // Predicated region
    $region21: #{basic_block_forward.5} parent=5 // pred_check
      %p125 = pneg %p124
    $region22: #{basic_block_forward.5} parent=5 // pred_check_branch
      %127 = sbr.rel (%p125) target = $region24
    $region23: #{basic_block_forward.5} parent=5 // pred_region
      // Predicated region
      $region25: #{basic_block_forward.5} parent=23 // pred_check
        %p128 = pneg %p29
      $region26: #{basic_block_forward.5} parent=23 // pred_check_branch
        %130 = sbr.rel (%p128) target = $region28
      $region27: #{basic_block_forward.5} parent=23 // pred_region
        %s131 = smul.u32 16, %s9
        %p132 = scmp.lt.s32.totalorder %s131, 63
        %s133 = scalar_select %p132, %s131, 63
        %s134 = smul.addr %s133, 8
        %s135 = scalar_lea.vmem %s0, %s134
        %s136 = smul.u32 16, %s9
      $region28: #{basic_block_forward.5} parent=23 // pred_fallthru
        _
    $region24: #{basic_block_forward.5} parent=5 // pred_fallthru
      _
    %p137 = scmp.le.s32.totalorder 1, %s9
    %p138 = scmp.lt.s32.totalorder %s9, 5
    %p139 = pnand %p137, %p138
    %p140 = pneg %p139
    // Predicated region
    $region29: #{basic_block_forward.5} parent=5 // pred_check
      _
    $region30: #{basic_block_forward.5} parent=5 // pred_check_branch
      %142 = sbr.rel (%p139) target = $region32
    $region31: #{basic_block_forward.5} parent=5 // pred_region
      %s143 = ssub.s32 %s9, 1
      %s144 = smul.u32 16, %s14
      %p145 = scmp.lt.s32.totalorder %s144, 63
      %s146 = scalar_select %p145, %s144, 63
      %s147 = smul.addr %s146, 8
      %s148 = scalar_lea.vmem %s0, %s147
      %p149 = pneg %p35
      %p150 = pneg %p32
      %p151 = pneg %p56
      %p152 = pneg %p53
      %p153 = pneg %p77
      %p154 = pneg %p74
      %p155 = pneg %p103
      %p156 = pneg %p100
      %s157 = smul.u32 16, %s14
      %p158 = scmp.lt.s32.totalorder %s157, 63
      %s159 = scalar_select %p158, %s157, 63
      %s160 = smul.addr %s159, 4
      %s161 = scalar_lea.vmem %s3, %s160
      %s162 = smul.u32 16, %s14
      %p163 = scmp.lt.s32.totalorder %s162, 63
      %s164 = scalar_select %p163, %s162, 63
      %s165 = smul.addr %s164, 8
      %s166 = scalar_lea.vmem %s0, %s165
      %s167 = smul.u32 16, %s14
      %s168 = smul.u32 16, %s14
      %p169 = scmp.lt.s32.totalorder %s168, 63
      %s170 = scalar_select %p169, %s168, 63
      %s171 = smul.addr %s170, 4
      %s172 = scalar_lea.vmem %s3, %s171
      %s173 = smul.u32 16, %s14
      %v174 = vld [vmem:[%s166] sm:$0xff]
      %v175 = vld [vmem:[%s166 + $0x8] sm:$0xff]
      %v176 = vld [vmem:[%s166 + $0x10] sm:$0xff]
      %v177 = vld [vmem:[%s166 + $0x18] sm:$0xff]
      %v178 = vld [vmem:[%s166 + $0x20] sm:$0xff]
      %v179 = vld [vmem:[%s166 + $0x28] sm:$0xff]
      %v180 = vld [vmem:[%s166 + $0x30] sm:$0xff]
      %v181 = vld [vmem:[%s166 + $0x38] sm:$0xff]
      %v182 = vld [vmem:[%s166 + $0x40] sm:$0xff]
      %v183 = vld [vmem:[%s166 + $0x48] sm:$0xff]
      %v184 = vld [vmem:[%s166 + $0x50] sm:$0xff]
      %v185 = vld [vmem:[%s166 + $0x58] sm:$0xff]
      %v186 = vld [vmem:[%s166 + $0x60] sm:$0xff]
      %v187 = vld [vmem:[%s166 + $0x68] sm:$0xff]
      %v188 = vld [vmem:[%s166 + $0x70] sm:$0xff]
      %v189 = vld [vmem:[%s166 + $0x78] sm:$0xff]
      %v190 = vld [vmem:[%s1] sm:$0x1]
      %v192 = vlaneseq
      %v193 = vshrl.u32 %v192, 7
      %v194 = vsub.s32 0, %v193
      %v195 = vrot.slane %v190, %v194
      %v197 = vmul.f32 %v174, %v195
      %v198 = vmul.f32 %v175, %v195
      %v199 = vmul.f32 %v176, %v195
      %v200 = vmul.f32 %v177, %v195
      %v201 = vmul.f32 %v178, %v195
      %v202 = vmul.f32 %v179, %v195
      %v203 = vmul.f32 %v180, %v195
      %v204 = vmul.f32 %v181, %v195
      %v205 = vmul.f32 %v182, %v195
      %v206 = vmul.f32 %v183, %v195
      %v207 = vmul.f32 %v184, %v195
      %v208 = vmul.f32 %v185, %v195
      %v209 = vmul.f32 %v186, %v195
      %v210 = vmul.f32 %v187, %v195
      %v211 = vmul.f32 %v188, %v195
      %v212 = vmul.f32 %v189, %v195
      %v213 = vld [vmem:[%s2] sm:$0x1]
      %v215 = vlaneseq
      %v216 = vshrl.u32 %v215, 7
      %v217 = vsub.s32 0, %v216
      %v218 = vrot.slane %v213, %v217
      %v220 = vadd.f32 %v197, %v218
      %v221 = vadd.f32 %v198, %v218
      %v222 = vadd.f32 %v199, %v218
      %v223 = vadd.f32 %v200, %v218
      %v224 = vadd.f32 %v201, %v218
      %v225 = vadd.f32 %v202, %v218
      %v226 = vadd.f32 %v203, %v218
      %v227 = vadd.f32 %v204, %v218
      %v228 = vadd.f32 %v205, %v218
      %v229 = vadd.f32 %v206, %v218
      %v230 = vadd.f32 %v207, %v218
      %v231 = vadd.f32 %v208, %v218
      %v232 = vadd.f32 %v209, %v218
      %v233 = vadd.f32 %v210, %v218
      %v234 = vadd.f32 %v211, %v218
      %v235 = vadd.f32 %v212, %v218
      %v236 = vmax.f32 %v220, 0.0
      %v237 = vmax.f32 %v221, 0.0
      %v238 = vmax.f32 %v222, 0.0
      %v239 = vmax.f32 %v223, 0.0
      %v240 = vmax.f32 %v224, 0.0
      %v241 = vmax.f32 %v225, 0.0
      %v242 = vmax.f32 %v226, 0.0
      %v243 = vmax.f32 %v227, 0.0
      %v244 = vmax.f32 %v228, 0.0
      %v245 = vmax.f32 %v229, 0.0
      %v246 = vmax.f32 %v230, 0.0
      %v247 = vmax.f32 %v231, 0.0
      %v248 = vmax.f32 %v232, 0.0
      %v249 = vmax.f32 %v233, 0.0
      %v250 = vmax.f32 %v234, 0.0
      %v251 = vmax.f32 %v235, 0.0
      %v252 = vpack.c.bf16 %v237, %v236
      %v253 = vpack.c.bf16 %v239, %v238
      %v254 = vpack.c.bf16 %v241, %v240
      %v255 = vpack.c.bf16 %v243, %v242
      %v256 = vpack.c.bf16 %v245, %v244
      %v257 = vpack.c.bf16 %v247, %v246
      %v258 = vpack.c.bf16 %v249, %v248
      %v259 = vpack.c.bf16 %v251, %v250
      %v268 = vunpack.c.l.b16 %v252
      %v269 = vunpack.c.h.b16 %v252
      %v270 = vunpack.c.l.b16 %v253
      %v271 = vunpack.c.h.b16 %v253
      %v272 = vunpack.c.l.b16 %v254
      %v273 = vunpack.c.h.b16 %v254
      %v274 = vunpack.c.l.b16 %v255
      %v275 = vunpack.c.h.b16 %v255
      %v276 = vunpack.c.l.b16 %v256
      %v277 = vunpack.c.h.b16 %v256
      %v278 = vunpack.c.l.b16 %v257
      %v279 = vunpack.c.h.b16 %v257
      %v280 = vunpack.c.l.b16 %v258
      %v281 = vunpack.c.h.b16 %v258
      %v282 = vunpack.c.l.b16 %v259
      %v283 = vunpack.c.h.b16 %v259
      %v284 = vpack.c.b16 %v268, %v268
      %v285 = vpack.c.b16 %v269, %v269
      %v286 = vpack.c.b16 %v270, %v270
      %v287 = vpack.c.b16 %v271, %v271
      %v288 = vpack.c.b16 %v272, %v272
      %v289 = vpack.c.b16 %v273, %v273
      %v290 = vpack.c.b16 %v274, %v274
      %v291 = vpack.c.b16 %v275, %v275
      %v292 = vpack.c.b16 %v276, %v276
      %v293 = vpack.c.b16 %v277, %v277
      %v294 = vpack.c.b16 %v278, %v278
      %v295 = vpack.c.b16 %v279, %v279
      %v296 = vpack.c.b16 %v280, %v280
      %v297 = vpack.c.b16 %v281, %v281
      %v298 = vpack.c.b16 %v282, %v282
      %v299 = vpack.c.b16 %v283, %v283
      %316 = vst [vmem:[%s172] sm:$0xf] %v284
      %317 = vst [vmem:[%s172 + $0x4] sm:$0xf] %v285
      %318 = vst [vmem:[%s172 + $0x8] sm:$0xf] %v286
      %319 = vst [vmem:[%s172 + $0xc] sm:$0xf] %v287
      %320 = vst [vmem:[%s172 + $0x10] sm:$0xf] %v288
      %321 = vst [vmem:[%s172 + $0x14] sm:$0xf] %v289
      %322 = vst [vmem:[%s172 + $0x18] sm:$0xf] %v290
      %323 = vst [vmem:[%s172 + $0x1c] sm:$0xf] %v291
      %324 = vst [vmem:[%s172 + $0x20] sm:$0xf] %v292
      %325 = vst [vmem:[%s172 + $0x24] sm:$0xf] %v293
      %326 = vst [vmem:[%s172 + $0x28] sm:$0xf] %v294
      %327 = vst [vmem:[%s172 + $0x2c] sm:$0xf] %v295
      %328 = vst [vmem:[%s172 + $0x30] sm:$0xf] %v296
      %329 = vst [vmem:[%s172 + $0x34] sm:$0xf] %v297
      %330 = vst [vmem:[%s172 + $0x38] sm:$0xf] %v298
      %331 = vst [vmem:[%s172 + $0x3c] sm:$0xf] %v299
      %s332 = smul.u32 16, %s14
      %p333 = scmp.lt.s32.totalorder %s332, 63
      %s334 = scalar_select %p333, %s332, 63
      %s335 = smul.addr %s334, 4
      %s336 = scalar_lea.vmem %s3, %s335
      // Predicated region
      $region33: #{basic_block_forward.5} parent=31 // pred_check
        %p337 = pneg %p100
      $region34: #{basic_block_forward.5} parent=31 // pred_check_branch
        %339 = sbr.rel (%p337) target = $region36
      $region35: #{basic_block_forward.5} parent=31 // pred_region
        %s340 = smul.u32 16, %s14
      $region36: #{basic_block_forward.5} parent=31 // pred_fallthru
        _
    $region32: #{basic_block_forward.5} parent=5 // pred_fallthru
      _
    %p341 = scmp.le.s32.totalorder 2, %s9
    // Predicated region
    $region37: #{basic_block_forward.5} parent=5 // pred_check
      %p342 = pneg %p341
    $region38: #{basic_block_forward.5} parent=5 // pred_check_branch
      %344 = sbr.rel (%p342) target = $region40
    $region39: #{basic_block_forward.5} parent=5 // pred_region
      %s345 = ssub.s32 %s9, 2
      // Predicated region
      $region41: #{basic_block_forward.5} parent=39 // pred_check
        %p346 = pneg %p106
      $region42: #{basic_block_forward.5} parent=39 // pred_check_branch
        %348 = sbr.rel (%p346) target = $region44
      $region43: #{basic_block_forward.5} parent=39 // pred_region
        %s349 = smul.u32 16, %s15
        %p350 = scmp.lt.s32.totalorder %s349, 63
        %s351 = scalar_select %p350, %s349, 63
        %s352 = smul.addr %s351, 4
        %s353 = scalar_lea.vmem %s3, %s352
      $region44: #{basic_block_forward.5} parent=39 // pred_fallthru
        _
    $region40: #{basic_block_forward.5} parent=5 // pred_fallthru
      _
  $region6: #{basic_block_forward.5} parent=0 // loop_footer
    %s13 = sadd.s32 1, %s9
  $region7: #{basic_block_forward.5} parent=0 // loop_footer_branch
    %8 = sbr.rel target = $region3
  $region8: #{basic_block_forward.5} parent=0 // loop_exit
    _

// kernel: basic_block_forward.4
$region0: #{basic_block_forward.4}
  #allocation0 [shape = 'u32[]', space=smem, size = 0x4, offset = 0x4, fixed_abs, tag = 'smem constant byte address 0x4 - core index']
  #allocation1 [shape = 'u32[144,128]{1,0:T(1,128)}', space=vmem, size = 0x12000, scoped, tag = 'internal scratch']
  %s0 = inlined_call_operand.vmem [shape: bf16[512,36], index: 0, kind: input, shape index: {}]
  %s1 = inlined_call_operand.vmem [shape: bf16[36,128], index: 1, kind: input, shape index: {}]
  %s2 = inlined_call_operand.vmem [shape: f32[512,128], index: 2, kind: output, shape index: {0}]
  %s3 = inlined_call_operand.vmem [shape: f32[32,128], index: 3, kind: output, shape index: {1}]
  %4 = xla_tuple %s2, %s3
  %s5 = sld [smem:[#allocation0]]
  $region49: #{basic_block_forward.4} parent=0
    _
  %s7 = ssub.s32 1, %s5
  %s8 = scalar_select 0, %s7, %s5
  loop: start=0, step=1, limit=6
  $region2: #{basic_block_forward.4} parent=0 // loop_pre_header
    _
  $region3: #{basic_block_forward.4} parent=0 // loop_header
    %s10 = sphi 0, %s14
    %p11 = scmp.ge.s32.totalorder %s10, 6
    %s20 = sphi 0, %s22
    %s23 = sphi 0, %s20
    %s24 = sphi 0, %s23
    %s40 = sphi 0, %s24
    %s44 = sphi 0, %s44
    %s46 = sphi 0, %s44
    %s47 = sphi 0, %s46
    %s61 = sphi 0, %s47
    %s67 = sphi 0, %s69
    %s70 = sphi 0, %s67
    %s71 = sphi 0, %s70
    %s87 = sphi 0, %s71
    %s93 = sphi 0, %s95
    %s96 = sphi 0, %s93
    %s97 = sphi 0, %s96
    %s113 = sphi 0, %s97
  $region4: #{basic_block_forward.4} parent=0 // loop_header_branch
    %13 = sbr.rel (%p11) target = $region8
  $region5: #{basic_block_forward.4} parent=0 // loop_body
    %s15 = ssub.s32 %s10, 1
    %s16 = ssub.s32 %s10, 2
    %s17 = sadd.s32 %s10, 1
    %s18 = ssub.s32 %s10, %s17
    %p19 = scmp.eq.s32.totalorder %s18, 0
    %s21 = sadd.s32 %s20, 1
    %s22 = scalar_select %p19, %s20, %s21
    %p25 = pneg %p19
    %p26 = scmp.eq.s32.totalorder %s10, 3
    %p27 = por %p25, %p26
    %p28 = scmp.ne.s32.totalorder %s20, %s23
    %p29 = scmp.eq.s32.totalorder %s10, 0
    %p30 = por %p28, %p29
    %p31 = scmp.ne.s32.totalorder %s20, %s23
    %p32 = scmp.eq.s32.totalorder %s15, 3
    %p33 = por %p31, %p32
    %p34 = scmp.ne.s32.totalorder %s23, %s24
    %p35 = scmp.eq.s32.totalorder %s15, 0
    %p36 = por %p34, %p35
    %p37 = scmp.ne.s32.totalorder %s23, %s24
    %p38 = scmp.eq.s32.totalorder %s16, 3
    %p39 = por %p37, %p38
    %p41 = scmp.ne.s32.totalorder %s24, %s40
    %p42 = scmp.eq.s32.totalorder %s16, 0
    %p43 = por %p41, %p42
    %s45 = sadd.s32 %s44, 1
    %p48 = scmp.eq.s32.totalorder %s10, 3
    %p49 = scmp.ne.s32.totalorder %s44, %s46
    %p50 = scmp.eq.s32.totalorder %s10, 0
    %p51 = por %p49, %p50
    %p52 = scmp.ne.s32.totalorder %s44, %s46
    %p53 = scmp.eq.s32.totalorder %s15, 3
    %p54 = por %p52, %p53
    %p55 = scmp.ne.s32.totalorder %s46, %s47
    %p56 = scmp.eq.s32.totalorder %s15, 0
    %p57 = por %p55, %p56
    %p58 = scmp.ne.s32.totalorder %s46, %s47
    %p59 = scmp.eq.s32.totalorder %s16, 3
    %p60 = por %p58, %p59
    %p62 = scmp.ne.s32.totalorder %s47, %s61
    %p63 = scmp.eq.s32.totalorder %s16, 0
    %p64 = por %p62, %p63
    %s65 = ssub.s32 %s10, %s17
    %p66 = scmp.eq.s32.totalorder %s65, 0
    %s68 = sadd.s32 %s67, 1
    %s69 = scalar_select %p66, %s67, %s68
    %p72 = pneg %p66
    %p73 = scmp.eq.s32.totalorder %s10, 3
    %p74 = por %p72, %p73
    %p75 = scmp.ne.s32.totalorder %s67, %s70
    %p76 = scmp.eq.s32.totalorder %s10, 0
    %p77 = por %p75, %p76
    %p78 = scmp.ne.s32.totalorder %s67, %s70
    %p79 = scmp.eq.s32.totalorder %s15, 3
    %p80 = por %p78, %p79
    %p81 = scmp.ne.s32.totalorder %s70, %s71
    %p82 = scmp.eq.s32.totalorder %s15, 0
    %p83 = por %p81, %p82
    %p84 = scmp.ne.s32.totalorder %s70, %s71
    %p85 = scmp.eq.s32.totalorder %s16, 3
    %p86 = por %p84, %p85
    %p88 = scmp.ne.s32.totalorder %s71, %s87
    %p89 = scmp.eq.s32.totalorder %s16, 0
    %p90 = por %p88, %p89
    %s91 = ssub.s32 %s10, %s17
    %p92 = scmp.eq.s32.totalorder %s91, 0
    %s94 = sadd.s32 %s93, 1
    %s95 = scalar_select %p92, %s93, %s94
    %p98 = pneg %p92
    %p99 = scmp.eq.s32.totalorder %s10, 3
    %p100 = por %p98, %p99
    %p101 = scmp.ne.s32.totalorder %s93, %s96
    %p102 = scmp.eq.s32.totalorder %s10, 0
    %p103 = por %p101, %p102
    %p104 = scmp.ne.s32.totalorder %s93, %s96
    %p105 = scmp.eq.s32.totalorder %s15, 3
    %p106 = por %p104, %p105
    %p107 = scmp.ne.s32.totalorder %s96, %s97
    %p108 = scmp.eq.s32.totalorder %s15, 0
    %p109 = por %p107, %p108
    %p110 = scmp.ne.s32.totalorder %s96, %s97
    %p111 = scmp.eq.s32.totalorder %s16, 3
    %p112 = por %p110, %p111
    %p114 = scmp.ne.s32.totalorder %s97, %s113
    %p115 = scmp.eq.s32.totalorder %s16, 0
    %p116 = por %p114, %p115
    %p117 = scmp.le.s32.totalorder 1, %s10
    %p118 = scmp.lt.s32.totalorder %s10, 5
    %p119 = pnand %p117, %p118
    %p120 = pneg %p119
    // Predicated region
    $region9: #{basic_block_forward.4} parent=5 // pred_check
      _
    $region10: #{basic_block_forward.4} parent=5 // pred_check_branch
      %122 = sbr.rel (%p119) target = $region12
    $region11: #{basic_block_forward.4} parent=5 // pred_region
      %s123 = ssub.s32 %s10, 1
      // Predicated region
      $region13: #{basic_block_forward.4} parent=11 // pred_check
        %p124 = pneg %p57
      $region14: #{basic_block_forward.4} parent=11 // pred_check_branch
        %126 = sbr.rel (%p124) target = $region16
      $region15: #{basic_block_forward.4} parent=11 // pred_region
        _
      $region16: #{basic_block_forward.4} parent=11 // pred_fallthru
        _
    $region12: #{basic_block_forward.4} parent=5 // pred_fallthru
      _
    %p127 = scmp.lt.s32.totalorder %s10, 4
    // Predicated region
    $region17: #{basic_block_forward.4} parent=5 // pred_check
      %p128 = pneg %p127
    $region18: #{basic_block_forward.4} parent=5 // pred_check_branch
      %130 = sbr.rel (%p128) target = $region20
    $region19: #{basic_block_forward.4} parent=5 // pred_region
      // Predicated region
      $region21: #{basic_block_forward.4} parent=19 // pred_check
        %p131 = pneg %p30
      $region22: #{basic_block_forward.4} parent=19 // pred_check_branch
        %133 = sbr.rel (%p131) target = $region24
      $region23: #{basic_block_forward.4} parent=19 // pred_region
        %s134 = smul.u32 16, %s10
        %p135 = scmp.lt.s32.totalorder %s134, 63
        %s136 = scalar_select %p135, %s134, 63
        %s137 = smul.addr %s136, 4
        %s138 = scalar_lea.vmem %s0, %s137
        %s139 = smul.u32 16, %s10
      $region24: #{basic_block_forward.4} parent=19 // pred_fallthru
        _
    $region20: #{basic_block_forward.4} parent=5 // pred_fallthru
      _
    %p140 = scmp.le.s32.totalorder 1, %s10
    %p141 = scmp.lt.s32.totalorder %s10, 5
    %p142 = pnand %p140, %p141
    %p143 = pneg %p142
    // Predicated region
    $region25: #{basic_block_forward.4} parent=5 // pred_check
      _
    $region26: #{basic_block_forward.4} parent=5 // pred_check_branch
      %145 = sbr.rel (%p142) target = $region28
    $region27: #{basic_block_forward.4} parent=5 // pred_region
      %s146 = ssub.s32 %s10, 1
      %s147 = smul.u32 16, %s15
      %p148 = scmp.lt.s32.totalorder %s147, 63
      %s149 = scalar_select %p148, %s147, 63
      %s150 = smul.addr %s149, 4
      %s151 = scalar_lea.vmem %s0, %s150
      %p152 = pneg %p36
      %p153 = pneg %p33
      %p154 = pneg %p57
      %p155 = pneg %p54
      %p156 = pneg %p83
      %p157 = pneg %p80
      %s158 = smul.u32 16, %s15
      %p159 = scmp.lt.s32.totalorder %s158, 63
      %s160 = scalar_select %p159, %s158, 63
      %s161 = smul.addr %s160, 8
      %s162 = scalar_lea.vmem %s2, %s161
      %p163 = pneg %p109
      %p164 = pneg %p106
      %p165 = scmp.lt.s32.totalorder %s15, 3
      %s166 = scalar_select %p165, %s15, 3
      %s167 = smul.addr %s166, 8
      %s168 = scalar_lea.vmem %s3, %s167
      %s169 = smul.u32 16, %s15
      %p170 = scmp.lt.s32.totalorder %s169, 63
      %s171 = scalar_select %p170, %s169, 63
      %s172 = smul.addr %s171, 4
      %s173 = scalar_lea.vmem %s0, %s172
      %s174 = smul.u32 16, %s15
      %s175 = smul.u32 16, %s15
      %p176 = scmp.lt.s32.totalorder %s175, 63
      %s177 = scalar_select %p176, %s175, 63
      %s178 = smul.addr %s177, 8
      %s179 = scalar_lea.vmem %s2, %s178
      %s180 = smul.u32 16, %s15
      %p181 = scmp.lt.s32.totalorder %s15, 3
      %s182 = scalar_select %p181, %s15, 3
      %s183 = smul.addr %s182, 8
      %s184 = scalar_lea.vmem %s3, %s183
      %v186 = vld [vmem:[%s173] sm:$0xf]
      %v187 = vld [vmem:[%s173 + $0x4] sm:$0xf]
      %v188 = vld [vmem:[%s173 + $0x8] sm:$0xf]
      %v189 = vld [vmem:[%s173 + $0xc] sm:$0xf]
      %v190 = vld [vmem:[%s173 + $0x10] sm:$0xf]
      %v191 = vld [vmem:[%s173 + $0x14] sm:$0xf]
      %v192 = vld [vmem:[%s173 + $0x18] sm:$0xf]
      %v193 = vld [vmem:[%s173 + $0x1c] sm:$0xf]
      %v194 = vld [vmem:[%s173 + $0x20] sm:$0xf]
      %v195 = vld [vmem:[%s173 + $0x24] sm:$0xf]
      %v196 = vld [vmem:[%s173 + $0x28] sm:$0xf]
      %v197 = vld [vmem:[%s173 + $0x2c] sm:$0xf]
      %v198 = vld [vmem:[%s173 + $0x30] sm:$0xf]
      %v199 = vld [vmem:[%s173 + $0x34] sm:$0xf]
      %v200 = vld [vmem:[%s173 + $0x38] sm:$0xf]
      %v201 = vld [vmem:[%s173 + $0x3c] sm:$0xf]
      %v202 = vld [vmem:[%s1] sm:$0xf]
      %v203 = vld [vmem:[%s1 + $0x4] sm:$0xf]
      %v204 = vld [vmem:[%s1 + $0x8] sm:$0xf]
      %v205 = vld [vmem:[%s1 + $0xc] sm:$0xf]
      %v206 = vld [vmem:[%s1 + $0x10] sm:$0x3]
      %v223 = vunpack.c.l.b16 %v186
      %v224 = vunpack.c.l.b16 %v187
      %v225 = vunpack.c.l.b16 %v188
      %v226 = vunpack.c.l.b16 %v189
      %v227 = vunpack.c.l.b16 %v190
      %v228 = vunpack.c.l.b16 %v191
      %v229 = vunpack.c.l.b16 %v192
      %v230 = vunpack.c.l.b16 %v193
      %v231 = vunpack.c.l.b16 %v194
      %v232 = vunpack.c.l.b16 %v195
      %v233 = vunpack.c.l.b16 %v196
      %v234 = vunpack.c.l.b16 %v197
      %v235 = vunpack.c.l.b16 %v198
      %v236 = vunpack.c.l.b16 %v199
      %v237 = vunpack.c.l.b16 %v200
      %v238 = vunpack.c.l.b16 %v201
      %v239 = vpack.c.b16 %v224, %v223
      %v240 = vpack.c.b16 %v226, %v225
      %v241 = vpack.c.b16 %v228, %v227
      %v242 = vpack.c.b16 %v230, %v229
      %v243 = vpack.c.b16 %v232, %v231
      %v244 = vpack.c.b16 %v234, %v233
      %v245 = vpack.c.b16 %v236, %v235
      %v246 = vpack.c.b16 %v238, %v237
      %v252 = vunpack.c.l.b16 %v202
      %v253 = vunpack.c.l.b16 %v203
      %v254 = vunpack.c.l.b16 %v204
      %v255 = vunpack.c.l.b16 %v205
      %v256 = vunpack.c.l.b16 %v206
      %v257 = vpack.c.b16 %v253, %v252
      %v258 = vpack.c.b16 %v255, %v254
      %v259 = vpack.c.b16 %v256, %v256
      %vm262 = vcmask 293888
      %v264 = vsel %vm262, %v239, 0
      %v267 = vsel %vm262, %v240, 0
      %v270 = vsel %vm262, %v241, 0
      %v273 = vsel %vm262, %v242, 0
      %v276 = vsel %vm262, %v243, 0
      %v279 = vsel %vm262, %v244, 0
      %v282 = vsel %vm262, %v245, 0
      %v285 = vsel %vm262, %v246, 0
      %vm287 = vcmask 1041408
      %v289 = vsel %vm287, %v259, 0
      %291 = vmatprep.subr.bf16.mxu0 0
      %292 = vmatpush1.bf16.msra.mxu0 %v257
      %293 = vmatprep.subr.bf16.mxu0 0
      %294 = vmatpush1.bf16.msra.mxu0 %v258
      %295 = vmatprep.subr.bf16.mxu0 0
      %296 = vmatpush1.bf16.msra.mxu0 %v289
      %297 = vmatprep.subr.bf16.mxu0 0
      %298 = vmatpush1.bf16.msra.mxu0 0
      %299 = vmatprep.subr.bf16.mxu0 0
      %300 = vmatpush1.bf16.msra.mxu0 0
      %301 = vmatprep.subr.bf16.mxu0 0
      %302 = vmatpush1.bf16.msra.mxu0 0
      %303 = vmatprep.subr.bf16.mxu0 0
      %304 = vmatpush1.bf16.msra.mxu0 0
      %305 = vmatprep.subr.bf16.mxu0 0
      %306 = vmatpush1.bf16.msra.mxu0 0
      %307 = vmatprep.subr.bf16.mxu0 0
      %308 = vmatpush1.bf16.msra.mxu0 0
      %309 = vmatprep.subr.bf16.mxu0 0
      %310 = vmatpush1.bf16.msra.mxu0 0
      %311 = vmatprep.subr.bf16.mxu0 0
      %312 = vmatpush1.bf16.msra.mxu0 0
      %313 = vmatprep.subr.bf16.mxu0 0
      %314 = vmatpush1.bf16.msra.mxu0 0
      %315 = vmatprep.subr.bf16.mxu0 0
      %316 = vmatpush1.bf16.msra.mxu0 0
      %317 = vmatprep.subr.bf16.mxu0 0
      %318 = vmatpush1.bf16.msra.mxu0 0
      %319 = vmatprep.subr.bf16.mxu0 0
      %320 = vmatpush1.bf16.msra.mxu0 0
      %321 = vmatprep.subr.bf16.mxu0 0
      %322 = vmatpush1.bf16.msra.mxu0 0
      %323 = vmatprep.mubr.bf16.mxu0 0
      %324 = vmatmul.mubr.bf16.gmra.mrb[0].mxu0 %v264
      %v325 = vpop.f32.mrb[0].mxu0
      %v326 = vadd.f32 0.0, %v325
      %v327 = vpop.f32.mrb[0].mxu0
      %v328 = vpop.f32.mrb[0].mxu0
      %v329 = vadd.f32 0.0, %v328
      %v330 = vpop.f32.mrb[0].mxu0
      %331 = vmatprep.mubr.bf16.mxu0 0
      %332 = vmatmul.mubr.bf16.gmra.mrb[0].mxu0 %v267
      %v333 = vpop.f32.mrb[0].mxu0
      %v334 = vadd.f32 0.0, %v333
      %v335 = vpop.f32.mrb[0].mxu0
      %v336 = vpop.f32.mrb[0].mxu0
      %v337 = vadd.f32 0.0, %v336
      %v338 = vpop.f32.mrb[0].mxu0
      %339 = vmatprep.mubr.bf16.mxu0 0
      %340 = vmatmul.mubr.bf16.gmra.mrb[0].mxu0 %v270
      %v341 = vpop.f32.mrb[0].mxu0
      %v342 = vadd.f32 0.0, %v341
      %v343 = vpop.f32.mrb[0].mxu0
      %v344 = vpop.f32.mrb[0].mxu0
      %v345 = vadd.f32 0.0, %v344
      %v346 = vpop.f32.mrb[0].mxu0
      %347 = vmatprep.mubr.bf16.mxu0 0
      %348 = vmatmul.mubr.bf16.gmra.mrb[0].mxu0 %v273
      %v349 = vpop.f32.mrb[0].mxu0
      %v350 = vadd.f32 0.0, %v349
      %v351 = vpop.f32.mrb[0].mxu0
      %v352 = vpop.f32.mrb[0].mxu0
      %v353 = vadd.f32 0.0, %v352
      %v354 = vpop.f32.mrb[0].mxu0
      %355 = vmatprep.mubr.bf16.mxu0 0
      %356 = vmatmul.mubr.bf16.gmra.mrb[0].mxu0 %v276
      %v357 = vpop.f32.mrb[0].mxu0
      %v358 = vadd.f32 0.0, %v357
      %v359 = vpop.f32.mrb[0].mxu0
      %v360 = vpop.f32.mrb[0].mxu0
      %v361 = vadd.f32 0.0, %v360
      %v362 = vpop.f32.mrb[0].mxu0
      %363 = vmatprep.mubr.bf16.mxu0 0
      %364 = vmatmul.mubr.bf16.gmra.mrb[0].mxu0 %v279
      %v365 = vpop.f32.mrb[0].mxu0
      %v366 = vadd.f32 0.0, %v365
      %v367 = vpop.f32.mrb[0].mxu0
      %v368 = vpop.f32.mrb[0].mxu0
      %v369 = vadd.f32 0.0, %v368
      %v370 = vpop.f32.mrb[0].mxu0
      %371 = vmatprep.mubr.bf16.mxu0 0
      %372 = vmatmul.mubr.bf16.gmra.mrb[0].mxu0 %v282
      %v373 = vpop.f32.mrb[0].mxu0
      %v374 = vadd.f32 0.0, %v373
      %v375 = vpop.f32.mrb[0].mxu0
      %v376 = vpop.f32.mrb[0].mxu0
      %v377 = vadd.f32 0.0, %v376
      %v378 = vpop.f32.mrb[0].mxu0
      %379 = vmatprep.mubr.bf16.mxu0 0
      %380 = vmatmul.mubr.bf16.gmra.mrb[0].mxu0 %v285
      %v381 = vpop.f32.mrb[0].mxu0
      %v382 = vadd.f32 0.0, %v381
      %v383 = vpop.f32.mrb[0].mxu0
      %v384 = vpop.f32.mrb[0].mxu0
      %v385 = vadd.f32 0.0, %v384
      %v386 = vpop.f32.mrb[0].mxu0
      %387 = vdwg.mxu0
      %388 = vst [vmem:[%s179] sm:$0xff] %v326
      %389 = vst [vmem:[%s179 + $0x8] sm:$0xff] %v329
      %390 = vst [vmem:[%s179 + $0x10] sm:$0xff] %v334
      %391 = vst [vmem:[%s179 + $0x18] sm:$0xff] %v337
      %392 = vst [vmem:[%s179 + $0x20] sm:$0xff] %v342
      %393 = vst [vmem:[%s179 + $0x28] sm:$0xff] %v345
      %394 = vst [vmem:[%s179 + $0x30] sm:$0xff] %v350
      %395 = vst [vmem:[%s179 + $0x38] sm:$0xff] %v353
      %396 = vst [vmem:[%s179 + $0x40] sm:$0xff] %v358
      %397 = vst [vmem:[%s179 + $0x48] sm:$0xff] %v361
      %398 = vst [vmem:[%s179 + $0x50] sm:$0xff] %v366
      %399 = vst [vmem:[%s179 + $0x58] sm:$0xff] %v369
      %400 = vst [vmem:[%s179 + $0x60] sm:$0xff] %v374
      %401 = vst [vmem:[%s179 + $0x68] sm:$0xff] %v377
      %402 = vst [vmem:[%s179 + $0x70] sm:$0xff] %v382
      %403 = vst [vmem:[%s179 + $0x78] sm:$0xff] %v385
      %v404 = vadd.f32 %v326, %v329
      %v405 = vadd.f32 %v404, %v334
      %v406 = vadd.f32 %v405, %v337
      %v407 = vadd.f32 %v406, %v342
      %v408 = vadd.f32 %v407, %v345
      %v409 = vadd.f32 %v408, %v350
      %v410 = vadd.f32 %v409, %v353
      %v411 = vadd.f32 %v410, %v358
      %v412 = vadd.f32 %v411, %v361
      %v413 = vadd.f32 %v412, %v366
      %v414 = vadd.f32 %v413, %v369
      %v415 = vadd.f32 %v414, %v374
      %v416 = vadd.f32 %v415, %v377
      %v417 = vadd.f32 %v416, %v382
      %v418 = vadd.f32 %v417, %v385
      %v419 = vrot.slane %v418, 4
      %v420 = vadd.f32 %v418, %v419
      %v421 = vrot.slane %v420, 2
      %v422 = vadd.f32 %v420, %v421
      %v423 = vrot.slane %v422, 1
      %v424 = vadd.f32 %v422, %v423
      %v425 = vmul.f32 %v326, %v326
      %v426 = vmul.f32 %v329, %v329
      %v427 = vmul.f32 %v334, %v334
      %v428 = vmul.f32 %v337, %v337
      %v429 = vmul.f32 %v342, %v342
      %v430 = vmul.f32 %v345, %v345
      %v431 = vmul.f32 %v350, %v350
      %v432 = vmul.f32 %v353, %v353
      %v433 = vmul.f32 %v358, %v358
      %v434 = vmul.f32 %v361, %v361
      %v435 = vmul.f32 %v366, %v366
      %v436 = vmul.f32 %v369, %v369
      %v437 = vmul.f32 %v374, %v374
      %v438 = vmul.f32 %v377, %v377
      %v439 = vmul.f32 %v382, %v382
      %v440 = vmul.f32 %v385, %v385
      %v441 = vadd.f32 %v425, %v426
      %v442 = vadd.f32 %v441, %v427
      %v443 = vadd.f32 %v442, %v428
      %v444 = vadd.f32 %v443, %v429
      %v445 = vadd.f32 %v444, %v430
      %v446 = vadd.f32 %v445, %v431
      %v447 = vadd.f32 %v446, %v432
      %v448 = vadd.f32 %v447, %v433
      %v449 = vadd.f32 %v448, %v434
      %v450 = vadd.f32 %v449, %v435
      %v451 = vadd.f32 %v450, %v436
      %v452 = vadd.f32 %v451, %v437
      %v453 = vadd.f32 %v452, %v438
      %v454 = vadd.f32 %v453, %v439
      %v455 = vadd.f32 %v454, %v440
      %v456 = vrot.slane %v455, 4
      %v457 = vadd.f32 %v455, %v456
      %v458 = vrot.slane %v457, 2
      %v459 = vadd.f32 %v457, %v458
      %v460 = vrot.slane %v459, 1
      %v461 = vadd.f32 %v459, %v460
      %vm462 = vcmask 1040384
      %v463 = vsel %vm462, %v424, %v461
      %v464 = vsel %vm287, %v463, 0.0
      %465 = vst [vmem:[%s184] sm:$0xff] %v464
      %s466 = smul.u32 16, %s15
      %p467 = scmp.lt.s32.totalorder %s466, 63
      %s468 = scalar_select %p467, %s466, 63
      %s469 = smul.addr %s468, 8
      %s470 = scalar_lea.vmem %s2, %s469
      %p471 = scmp.lt.s32.totalorder %s15, 3
      %s472 = scalar_select %p471, %s15, 3
      %s473 = smul.addr %s472, 8
      %s474 = scalar_lea.vmem %s3, %s473
      // Predicated region
      $region29: #{basic_block_forward.4} parent=27 // pred_check
        %p475 = pneg %p80
      $region30: #{basic_block_forward.4} parent=27 // pred_check_branch
        %477 = sbr.rel (%p475) target = $region32
      $region31: #{basic_block_forward.4} parent=27 // pred_region
        %s478 = smul.u32 16, %s15
      $region32: #{basic_block_forward.4} parent=27 // pred_fallthru
        _
      // Predicated region
      $region33: #{basic_block_forward.4} parent=27 // pred_check
        %p479 = pneg %p106
      $region34: #{basic_block_forward.4} parent=27 // pred_check_branch
        %481 = sbr.rel (%p479) target = $region36
      $region35: #{basic_block_forward.4} parent=27 // pred_region
        _
      $region36: #{basic_block_forward.4} parent=27 // pred_fallthru
        _
    $region28: #{basic_block_forward.4} parent=5 // pred_fallthru
      _
    %p482 = scmp.le.s32.totalorder 2, %s10
    // Predicated region
    $region37: #{basic_block_forward.4} parent=5 // pred_check
      %p483 = pneg %p482
    $region38: #{basic_block_forward.4} parent=5 // pred_check_branch
      %485 = sbr.rel (%p483) target = $region40
    $region39: #{basic_block_forward.4} parent=5 // pred_region
      %s486 = ssub.s32 %s10, 2
      // Predicated region
      $region41: #{basic_block_forward.4} parent=39 // pred_check
        %p487 = pneg %p86
      $region42: #{basic_block_forward.4} parent=39 // pred_check_branch
        %489 = sbr.rel (%p487) target = $region44
      $region43: #{basic_block_forward.4} parent=39 // pred_region
        %s490 = smul.u32 16, %s16
        %p491 = scmp.lt.s32.totalorder %s490, 63
        %s492 = scalar_select %p491, %s490, 63
        %s493 = smul.addr %s492, 8
        %s494 = scalar_lea.vmem %s2, %s493
      $region44: #{basic_block_forward.4} parent=39 // pred_fallthru
        _
      // Predicated region
      $region45: #{basic_block_forward.4} parent=39 // pred_check
        %p495 = pneg %p112
      $region46: #{basic_block_forward.4} parent=39 // pred_check_branch
        %497 = sbr.rel (%p495) target = $region48
      $region47: #{basic_block_forward.4} parent=39 // pred_region
        %p498 = scmp.lt.s32.totalorder %s16, 3
        %s499 = scalar_select %p498, %s16, 3
        %s500 = smul.addr %s499, 8
        %s501 = scalar_lea.vmem %s3, %s500
      $region48: #{basic_block_forward.4} parent=39 // pred_fallthru
        _
    $region40: #{basic_block_forward.4} parent=5 // pred_fallthru
      _
  $region6: #{basic_block_forward.4} parent=0 // loop_footer
    %s14 = sadd.s32 1, %s10
  $region7: #{basic_block_forward.4} parent=0 // loop_footer_branch
    %9 = sbr.rel target = $region3
  $region8: #{basic_block_forward.4} parent=0 // loop_exit
    _

// kernel: basic_block_forward.7
$region0: #{basic_block_forward.7}
  #allocation0 [shape = 'u32[]', space=smem, size = 0x4, offset = 0x4, fixed_abs, tag = 'smem constant byte address 0x4 - core index']
  #allocation1 [shape = 'u32[144,128]{1,0:T(1,128)}', space=vmem, size = 0x12000, scoped, tag = 'internal scratch']
  %s0 = inlined_call_operand.vmem [shape: f32[512,128], index: 0, kind: input, shape index: {}]
  %s1 = inlined_call_operand.vmem [shape: f32[1,128], index: 1, kind: input, shape index: {}]
  %s2 = inlined_call_operand.vmem [shape: f32[1,128], index: 2, kind: input, shape index: {}]
  %s3 = inlined_call_operand.vmem [shape: f32[512,128], index: 3, kind: input, shape index: {}]
  %s4 = inlined_call_operand.vmem [shape: f32[512,128], index: 4, kind: output, shape index: {}]
  %s5 = sld [smem:[#allocation0]]
  $region49: #{basic_block_forward.7} parent=0
    _
  %s7 = ssub.s32 1, %s5
  %s8 = scalar_select 0, %s7, %s5
  loop: start=0, step=1, limit=6
  $region2: #{basic_block_forward.7} parent=0 // loop_pre_header
    _
  $region3: #{basic_block_forward.7} parent=0 // loop_header
    %s10 = sphi 0, %s14
    %p11 = scmp.ge.s32.totalorder %s10, 6
    %s20 = sphi 0, %s22
    %s23 = sphi 0, %s20
    %s24 = sphi 0, %s23
    %s40 = sphi 0, %s24
    %s44 = sphi 0, %s44
    %s46 = sphi 0, %s44
    %s47 = sphi 0, %s46
    %s61 = sphi 0, %s47
    %s65 = sphi 0, %s65
    %s67 = sphi 0, %s65
    %s68 = sphi 0, %s67
    %s82 = sphi 0, %s68
    %s88 = sphi 0, %s90
    %s91 = sphi 0, %s88
    %s92 = sphi 0, %s91
    %s108 = sphi 0, %s92
    %s114 = sphi 0, %s116
    %s117 = sphi 0, %s114
    %s118 = sphi 0, %s117
    %s134 = sphi 0, %s118
  $region4: #{basic_block_forward.7} parent=0 // loop_header_branch
    %13 = sbr.rel (%p11) target = $region8
  $region5: #{basic_block_forward.7} parent=0 // loop_body
    %s15 = ssub.s32 %s10, 1
    %s16 = ssub.s32 %s10, 2
    %s17 = sadd.s32 %s10, 1
    %s18 = ssub.s32 %s10, %s17
    %p19 = scmp.eq.s32.totalorder %s18, 0
    %s21 = sadd.s32 %s20, 1
    %s22 = scalar_select %p19, %s20, %s21
    %p25 = pneg %p19
    %p26 = scmp.eq.s32.totalorder %s10, 3
    %p27 = por %p25, %p26
    %p28 = scmp.ne.s32.totalorder %s20, %s23
    %p29 = scmp.eq.s32.totalorder %s10, 0
    %p30 = por %p28, %p29
    %p31 = scmp.ne.s32.totalorder %s20, %s23
    %p32 = scmp.eq.s32.totalorder %s15, 3
    %p33 = por %p31, %p32
    %p34 = scmp.ne.s32.totalorder %s23, %s24
    %p35 = scmp.eq.s32.totalorder %s15, 0
    %p36 = por %p34, %p35
    %p37 = scmp.ne.s32.totalorder %s23, %s24
    %p38 = scmp.eq.s32.totalorder %s16, 3
    %p39 = por %p37, %p38
    %p41 = scmp.ne.s32.totalorder %s24, %s40
    %p42 = scmp.eq.s32.totalorder %s16, 0
    %p43 = por %p41, %p42
    %s45 = sadd.s32 %s44, 1
    %p48 = scmp.eq.s32.totalorder %s10, 3
    %p49 = scmp.ne.s32.totalorder %s44, %s46
    %p50 = scmp.eq.s32.totalorder %s10, 0
    %p51 = por %p49, %p50
    %p52 = scmp.ne.s32.totalorder %s44, %s46
    %p53 = scmp.eq.s32.totalorder %s15, 3
    %p54 = por %p52, %p53
    %p55 = scmp.ne.s32.totalorder %s46, %s47
    %p56 = scmp.eq.s32.totalorder %s15, 0
    %p57 = por %p55, %p56
    %p58 = scmp.ne.s32.totalorder %s46, %s47
    %p59 = scmp.eq.s32.totalorder %s16, 3
    %p60 = por %p58, %p59
    %p62 = scmp.ne.s32.totalorder %s47, %s61
    %p63 = scmp.eq.s32.totalorder %s16, 0
    %p64 = por %p62, %p63
    %s66 = sadd.s32 %s65, 1
    %p69 = scmp.eq.s32.totalorder %s10, 3
    %p70 = scmp.ne.s32.totalorder %s65, %s67
    %p71 = scmp.eq.s32.totalorder %s10, 0
    %p72 = por %p70, %p71
    %p73 = scmp.ne.s32.totalorder %s65, %s67
    %p74 = scmp.eq.s32.totalorder %s15, 3
    %p75 = por %p73, %p74
    %p76 = scmp.ne.s32.totalorder %s67, %s68
    %p77 = scmp.eq.s32.totalorder %s15, 0
    %p78 = por %p76, %p77
    %p79 = scmp.ne.s32.totalorder %s67, %s68
    %p80 = scmp.eq.s32.totalorder %s16, 3
    %p81 = por %p79, %p80
    %p83 = scmp.ne.s32.totalorder %s68, %s82
    %p84 = scmp.eq.s32.totalorder %s16, 0
    %p85 = por %p83, %p84
    %s86 = ssub.s32 %s10, %s17
    %p87 = scmp.eq.s32.totalorder %s86, 0
    %s89 = sadd.s32 %s88, 1
    %s90 = scalar_select %p87, %s88, %s89
    %p93 = pneg %p87
    %p94 = scmp.eq.s32.totalorder %s10, 3
    %p95 = por %p93, %p94
    %p96 = scmp.ne.s32.totalorder %s88, %s91
    %p97 = scmp.eq.s32.totalorder %s10, 0
    %p98 = por %p96, %p97
    %p99 = scmp.ne.s32.totalorder %s88, %s91
    %p100 = scmp.eq.s32.totalorder %s15, 3
    %p101 = por %p99, %p100
    %p102 = scmp.ne.s32.totalorder %s91, %s92
    %p103 = scmp.eq.s32.totalorder %s15, 0
    %p104 = por %p102, %p103
    %p105 = scmp.ne.s32.totalorder %s91, %s92
    %p106 = scmp.eq.s32.totalorder %s16, 3
    %p107 = por %p105, %p106
    %p109 = scmp.ne.s32.totalorder %s92, %s108
    %p110 = scmp.eq.s32.totalorder %s16, 0
    %p111 = por %p109, %p110
    %s112 = ssub.s32 %s10, %s17
    %p113 = scmp.eq.s32.totalorder %s112, 0
    %s115 = sadd.s32 %s114, 1
    %s116 = scalar_select %p113, %s114, %s115
    %p119 = pneg %p113
    %p120 = scmp.eq.s32.totalorder %s10, 3
    %p121 = por %p119, %p120
    %p122 = scmp.ne.s32.totalorder %s114, %s117
    %p123 = scmp.eq.s32.totalorder %s10, 0
    %p124 = por %p122, %p123
    %p125 = scmp.ne.s32.totalorder %s114, %s117
    %p126 = scmp.eq.s32.totalorder %s15, 3
    %p127 = por %p125, %p126
    %p128 = scmp.ne.s32.totalorder %s117, %s118
    %p129 = scmp.eq.s32.totalorder %s15, 0
    %p130 = por %p128, %p129
    %p131 = scmp.ne.s32.totalorder %s117, %s118
    %p132 = scmp.eq.s32.totalorder %s16, 3
    %p133 = por %p131, %p132
    %p135 = scmp.ne.s32.totalorder %s118, %s134
    %p136 = scmp.eq.s32.totalorder %s16, 0
    %p137 = por %p135, %p136
    %p138 = scmp.le.s32.totalorder 1, %s10
    %p139 = scmp.lt.s32.totalorder %s10, 5
    %p140 = pnand %p138, %p139
    %p141 = pneg %p140
    // Predicated region
    $region9: #{basic_block_forward.7} parent=5 // pred_check
      _
    $region10: #{basic_block_forward.7} parent=5 // pred_check_branch
      %143 = sbr.rel (%p140) target = $region12
    $region11: #{basic_block_forward.7} parent=5 // pred_region
      %s144 = ssub.s32 %s10, 1
      // Predicated region
      $region13: #{basic_block_forward.7} parent=11 // pred_check
        %p145 = pneg %p57
      $region14: #{basic_block_forward.7} parent=11 // pred_check_branch
        %147 = sbr.rel (%p145) target = $region16
      $region15: #{basic_block_forward.7} parent=11 // pred_region
        _
      $region16: #{basic_block_forward.7} parent=11 // pred_fallthru
        _
      // Predicated region
      $region17: #{basic_block_forward.7} parent=11 // pred_check
        %p148 = pneg %p78
      $region18: #{basic_block_forward.7} parent=11 // pred_check_branch
        %150 = sbr.rel (%p148) target = $region20
      $region19: #{basic_block_forward.7} parent=11 // pred_region
        _
      $region20: #{basic_block_forward.7} parent=11 // pred_fallthru
        _
    $region12: #{basic_block_forward.7} parent=5 // pred_fallthru
      _
    %p151 = scmp.lt.s32.totalorder %s10, 4
    // Predicated region
    $region21: #{basic_block_forward.7} parent=5 // pred_check
      %p152 = pneg %p151
    $region22: #{basic_block_forward.7} parent=5 // pred_check_branch
      %154 = sbr.rel (%p152) target = $region24
    $region23: #{basic_block_forward.7} parent=5 // pred_region
      // Predicated region
      $region25: #{basic_block_forward.7} parent=23 // pred_check
        %p155 = pneg %p30
      $region26: #{basic_block_forward.7} parent=23 // pred_check_branch
        %157 = sbr.rel (%p155) target = $region28
      $region27: #{basic_block_forward.7} parent=23 // pred_region
        %s158 = smul.u32 16, %s10
        %p159 = scmp.lt.s32.totalorder %s158, 63
        %s160 = scalar_select %p159, %s158, 63
        %s161 = smul.addr %s160, 8
        %s162 = scalar_lea.vmem %s0, %s161
        %s163 = smul.u32 16, %s10
      $region28: #{basic_block_forward.7} parent=23 // pred_fallthru
        _
      // Predicated region
      $region29: #{basic_block_forward.7} parent=23 // pred_check
        %p164 = pneg %p98
      $region30: #{basic_block_forward.7} parent=23 // pred_check_branch
        %166 = sbr.rel (%p164) target = $region32
      $region31: #{basic_block_forward.7} parent=23 // pred_region
        %s167 = smul.u32 16, %s10
        %p168 = scmp.lt.s32.totalorder %s167, 63
        %s169 = scalar_select %p168, %s167, 63
        %s170 = smul.addr %s169, 8
        %s171 = scalar_lea.vmem %s3, %s170
        %s172 = smul.u32 16, %s10
      $region32: #{basic_block_forward.7} parent=23 // pred_fallthru
        _
    $region24: #{basic_block_forward.7} parent=5 // pred_fallthru
      _
    %p173 = scmp.le.s32.totalorder 1, %s10
    %p174 = scmp.lt.s32.totalorder %s10, 5
    %p175 = pnand %p173, %p174
    %p176 = pneg %p175
    // Predicated region
    $region33: #{basic_block_forward.7} parent=5 // pred_check
      _
    $region34: #{basic_block_forward.7} parent=5 // pred_check_branch
      %178 = sbr.rel (%p175) target = $region36
    $region35: #{basic_block_forward.7} parent=5 // pred_region
      %s179 = ssub.s32 %s10, 1
      %s180 = smul.u32 16, %s15
      %p181 = scmp.lt.s32.totalorder %s180, 63
      %s182 = scalar_select %p181, %s180, 63
      %s183 = smul.addr %s182, 8
      %s184 = scalar_lea.vmem %s0, %s183
      %p185 = pneg %p36
      %p186 = pneg %p33
      %p187 = pneg %p57
      %p188 = pneg %p54
      %p189 = pneg %p78
      %p190 = pneg %p75
      %s191 = smul.u32 16, %s15
      %p192 = scmp.lt.s32.totalorder %s191, 63
      %s193 = scalar_select %p192, %s191, 63
      %s194 = smul.addr %s193, 8
      %s195 = scalar_lea.vmem %s3, %s194
      %p196 = pneg %p104
      %p197 = pneg %p101
      %p198 = pneg %p130
      %p199 = pneg %p127
      %s200 = smul.u32 16, %s15
      %p201 = scmp.lt.s32.totalorder %s200, 63
      %s202 = scalar_select %p201, %s200, 63
      %s203 = smul.addr %s202, 8
      %s204 = scalar_lea.vmem %s4, %s203
      %s205 = smul.u32 16, %s15
      %p206 = scmp.lt.s32.totalorder %s205, 63
      %s207 = scalar_select %p206, %s205, 63
      %s208 = smul.addr %s207, 8
      %s209 = scalar_lea.vmem %s0, %s208
      %s210 = smul.u32 16, %s15
      %s211 = smul.u32 16, %s15
      %p212 = scmp.lt.s32.totalorder %s211, 63
      %s213 = scalar_select %p212, %s211, 63
      %s214 = smul.addr %s213, 8
      %s215 = scalar_lea.vmem %s3, %s214
      %s216 = smul.u32 16, %s15
      %s217 = smul.u32 16, %s15
      %p218 = scmp.lt.s32.totalorder %s217, 63
      %s219 = scalar_select %p218, %s217, 63
      %s220 = smul.addr %s219, 8
      %s221 = scalar_lea.vmem %s4, %s220
      %s222 = smul.u32 16, %s15
      %v223 = vld [vmem:[%s209] sm:$0xff]
      %v224 = vld [vmem:[%s209 + $0x8] sm:$0xff]
      %v225 = vld [vmem:[%s209 + $0x10] sm:$0xff]
      %v226 = vld [vmem:[%s209 + $0x18] sm:$0xff]
      %v227 = vld [vmem:[%s209 + $0x20] sm:$0xff]
      %v228 = vld [vmem:[%s209 + $0x28] sm:$0xff]
      %v229 = vld [vmem:[%s209 + $0x30] sm:$0xff]
      %v230 = vld [vmem:[%s209 + $0x38] sm:$0xff]
      %v231 = vld [vmem:[%s209 + $0x40] sm:$0xff]
      %v232 = vld [vmem:[%s209 + $0x48] sm:$0xff]
      %v233 = vld [vmem:[%s209 + $0x50] sm:$0xff]
      %v234 = vld [vmem:[%s209 + $0x58] sm:$0xff]
      %v235 = vld [vmem:[%s209 + $0x60] sm:$0xff]
      %v236 = vld [vmem:[%s209 + $0x68] sm:$0xff]
      %v237 = vld [vmem:[%s209 + $0x70] sm:$0xff]
      %v238 = vld [vmem:[%s209 + $0x78] sm:$0xff]
      %v239 = vld [vmem:[%s1] sm:$0x1]
      %v241 = vlaneseq
      %v242 = vshrl.u32 %v241, 7
      %v243 = vsub.s32 0, %v242
      %v244 = vrot.slane %v239, %v243
      %v246 = vmul.f32 %v223, %v244
      %v247 = vmul.f32 %v224, %v244
      %v248 = vmul.f32 %v225, %v244
      %v249 = vmul.f32 %v226, %v244
      %v250 = vmul.f32 %v227, %v244
      %v251 = vmul.f32 %v228, %v244
      %v252 = vmul.f32 %v229, %v244
      %v253 = vmul.f32 %v230, %v244
      %v254 = vmul.f32 %v231, %v244
      %v255 = vmul.f32 %v232, %v244
      %v256 = vmul.f32 %v233, %v244
      %v257 = vmul.f32 %v234, %v244
      %v258 = vmul.f32 %v235, %v244
      %v259 = vmul.f32 %v236, %v244
      %v260 = vmul.f32 %v237, %v244
      %v261 = vmul.f32 %v238, %v244
      %v262 = vld [vmem:[%s2] sm:$0x1]
      %v264 = vlaneseq
      %v265 = vshrl.u32 %v264, 7
      %v266 = vsub.s32 0, %v265
      %v267 = vrot.slane %v262, %v266
      %v269 = vadd.f32 %v246, %v267
      %v270 = vadd.f32 %v247, %v267
      %v271 = vadd.f32 %v248, %v267
      %v272 = vadd.f32 %v249, %v267
      %v273 = vadd.f32 %v250, %v267
      %v274 = vadd.f32 %v251, %v267
      %v275 = vadd.f32 %v252, %v267
      %v276 = vadd.f32 %v253, %v267
      %v277 = vadd.f32 %v254, %v267
      %v278 = vadd.f32 %v255, %v267
      %v279 = vadd.f32 %v256, %v267
      %v280 = vadd.f32 %v257, %v267
      %v281 = vadd.f32 %v258, %v267
      %v282 = vadd.f32 %v259, %v267
      %v283 = vadd.f32 %v260, %v267
      %v284 = vadd.f32 %v261, %v267
      %v285 = vld [vmem:[%s215] sm:$0xff]
      %v286 = vld [vmem:[%s215 + $0x8] sm:$0xff]
      %v287 = vld [vmem:[%s215 + $0x10] sm:$0xff]
      %v288 = vld [vmem:[%s215 + $0x18] sm:$0xff]
      %v289 = vld [vmem:[%s215 + $0x20] sm:$0xff]
      %v290 = vld [vmem:[%s215 + $0x28] sm:$0xff]
      %v291 = vld [vmem:[%s215 + $0x30] sm:$0xff]
      %v292 = vld [vmem:[%s215 + $0x38] sm:$0xff]
      %v293 = vld [vmem:[%s215 + $0x40] sm:$0xff]
      %v294 = vld [vmem:[%s215 + $0x48] sm:$0xff]
      %v295 = vld [vmem:[%s215 + $0x50] sm:$0xff]
      %v296 = vld [vmem:[%s215 + $0x58] sm:$0xff]
      %v297 = vld [vmem:[%s215 + $0x60] sm:$0xff]
      %v298 = vld [vmem:[%s215 + $0x68] sm:$0xff]
      %v299 = vld [vmem:[%s215 + $0x70] sm:$0xff]
      %v300 = vld [vmem:[%s215 + $0x78] sm:$0xff]
      %v301 = vadd.f32 %v269, %v285
      %v302 = vadd.f32 %v270, %v286
      %v303 = vadd.f32 %v271, %v287
      %v304 = vadd.f32 %v272, %v288
      %v305 = vadd.f32 %v273, %v289
      %v306 = vadd.f32 %v274, %v290
      %v307 = vadd.f32 %v275, %v291
      %v308 = vadd.f32 %v276, %v292
      %v309 = vadd.f32 %v277, %v293
      %v310 = vadd.f32 %v278, %v294
      %v311 = vadd.f32 %v279, %v295
      %v312 = vadd.f32 %v280, %v296
      %v313 = vadd.f32 %v281, %v297
      %v314 = vadd.f32 %v282, %v298
      %v315 = vadd.f32 %v283, %v299
      %v316 = vadd.f32 %v284, %v300
      %v317 = vmax.f32 %v301, 0.0
      %v318 = vmax.f32 %v302, 0.0
      %v319 = vmax.f32 %v303, 0.0
      %v320 = vmax.f32 %v304, 0.0
      %v321 = vmax.f32 %v305, 0.0
      %v322 = vmax.f32 %v306, 0.0
      %v323 = vmax.f32 %v307, 0.0
      %v324 = vmax.f32 %v308, 0.0
      %v325 = vmax.f32 %v309, 0.0
      %v326 = vmax.f32 %v310, 0.0
      %v327 = vmax.f32 %v311, 0.0
      %v328 = vmax.f32 %v312, 0.0
      %v329 = vmax.f32 %v313, 0.0
      %v330 = vmax.f32 %v314, 0.0
      %v331 = vmax.f32 %v315, 0.0
      %v332 = vmax.f32 %v316, 0.0
      %333 = vst [vmem:[%s221] sm:$0xff] %v317
      %334 = vst [vmem:[%s221 + $0x8] sm:$0xff] %v318
      %335 = vst [vmem:[%s221 + $0x10] sm:$0xff] %v319
      %336 = vst [vmem:[%s221 + $0x18] sm:$0xff] %v320
      %337 = vst [vmem:[%s221 + $0x20] sm:$0xff] %v321
      %338 = vst [vmem:[%s221 + $0x28] sm:$0xff] %v322
      %339 = vst [vmem:[%s221 + $0x30] sm:$0xff] %v323
      %340 = vst [vmem:[%s221 + $0x38] sm:$0xff] %v324
      %341 = vst [vmem:[%s221 + $0x40] sm:$0xff] %v325
      %342 = vst [vmem:[%s221 + $0x48] sm:$0xff] %v326
      %343 = vst [vmem:[%s221 + $0x50] sm:$0xff] %v327
      %344 = vst [vmem:[%s221 + $0x58] sm:$0xff] %v328
      %345 = vst [vmem:[%s221 + $0x60] sm:$0xff] %v329
      %346 = vst [vmem:[%s221 + $0x68] sm:$0xff] %v330
      %347 = vst [vmem:[%s221 + $0x70] sm:$0xff] %v331
      %348 = vst [vmem:[%s221 + $0x78] sm:$0xff] %v332
      %s349 = smul.u32 16, %s15
      %p350 = scmp.lt.s32.totalorder %s349, 63
      %s351 = scalar_select %p350, %s349, 63
      %s352 = smul.addr %s351, 8
      %s353 = scalar_lea.vmem %s4, %s352
      // Predicated region
      $region37: #{basic_block_forward.7} parent=35 // pred_check
        %p354 = pneg %p127
      $region38: #{basic_block_forward.7} parent=35 // pred_check_branch
        %356 = sbr.rel (%p354) target = $region40
      $region39: #{basic_block_forward.7} parent=35 // pred_region
        %s357 = smul.u32 16, %s15
      $region40: #{basic_block_forward.7} parent=35 // pred_fallthru
        _
    $region36: #{basic_block_forward.7} parent=5 // pred_fallthru
      _
    %p358 = scmp.le.s32.totalorder 2, %s10
    // Predicated region
    $region41: #{basic_block_forward.7} parent=5 // pred_check
      %p359 = pneg %p358
    $region42: #{basic_block_forward.7} parent=5 // pred_check_branch
      %361 = sbr.rel (%p359) target = $region44
    $region43: #{basic_block_forward.7} parent=5 // pred_region
      %s362 = ssub.s32 %s10, 2
      // Predicated region
      $region45: #{basic_block_forward.7} parent=43 // pred_check
        %p363 = pneg %p133
      $region46: #{basic_block_forward.7} parent=43 // pred_check_branch
        %365 = sbr.rel (%p363) target = $region48
      $region47: #{basic_block_forward.7} parent=43 // pred_region
        %s366 = smul.u32 16, %s16
        %p367 = scmp.lt.s32.totalorder %s366, 63
        %s368 = scalar_select %p367, %s366, 63
        %s369 = smul.addr %s368, 8
        %s370 = scalar_lea.vmem %s4, %s369
      $region48: #{basic_block_forward.7} parent=43 // pred_fallthru
        _
    $region44: #{basic_block_forward.7} parent=5 // pred_fallthru
      _
  $region6: #{basic_block_forward.7} parent=0 // loop_footer
    %s14 = sadd.s32 1, %s10
  $region7: #{basic_block_forward.7} parent=0 // loop_footer_branch
    %9 = sbr.rel target = $region3
  $region8: #{basic_block_forward.7} parent=0 // loop_exit
    _

</llo_original>
